<compile_context>
chip_gen: v5e
topology: v5e:2x2
jax: 0.10.0
libtpu: 0.0.40
codegen_flags: <defaults>
</compile_context>

<pallas_src>
import jax
import jax.numpy as jnp
from jax import lax
from jax.experimental import pallas as pl
from jax.experimental.pallas import tpu as pltpu

NUM_GROUPS = 32      # nn.GroupNorm(32, out_dims)
GN_EPS = 1e-5        # PyTorch GroupNorm default eps
_MISH_THRESH = 20.0  # F.softplus threshold (overflow clamp for exp)


def _make_kernel(batch_block: int, pad_cols: int):
    def kernel(x_ref, w_ref, gavg_ref, params_ref, o_ref):
        # x_ref:      (bb, C_in, L_pad)   batch block (last dim lane-dense)
        # w_ref:      (C_out, C_in)       conv weight (kernel_size=1 squeezed)
        # gavg_ref:   (C_out, C_out)      group average+broadcast matrix (f32)
        # params_ref: (C_out, 3)          packed [bias, gamma, beta] (f32)
        # o_ref:      (bb, C_out, L_pad)
        w = w_ref[...]                      # native dtype straight to the MXU
        gavg = gavg_ref[...]
        params = params_ref[...]
        bias = params[:, 0:1]
        gamma = params[:, 1:2]
        beta = params[:, 2:3]

        def body(s, carry):
            x = x_ref[s]                    # (C_in, L_pad)

            # --- 1x1 conv == channel matmul (MXU), f32 accumulation ---
            y = jnp.dot(w, x, preferred_element_type=jnp.float32) + bias

            # --- GroupNorm(32): per-channel sums, corrected for the zero-
            #     padded columns (conv output there is exactly `bias`), then
            #     ONE resident matmul that aggregates within groups AND
            #     broadcasts the group mean / mean-of-squares per channel ---
            ch_sum = jnp.sum(y, axis=1, keepdims=True)           # (C_out, 1)
            ch_sumsq = jnp.sum(y * y, axis=1, keepdims=True)     # (C_out, 1)
            if pad_cols:
                ch_sum = ch_sum - pad_cols * bias
                ch_sumsq = ch_sumsq - pad_cols * (bias * bias)
            stats_rhs = jnp.concatenate([ch_sum, ch_sumsq], axis=1)  # (C_out,2)
            stats = jnp.dot(gavg, stats_rhs,
                            preferred_element_type=jnp.float32)      # (C_out,2)
            mean_c = stats[:, 0:1]
            var_c = jnp.maximum(stats[:, 1:2] - mean_c * mean_c, 0.0)
            inv_std = lax.rsqrt(var_c + GN_EPS)

            # fold the affine into a single per-channel scale/shift
            scale = gamma * inv_std
            shift = beta - mean_c * scale
            yn = y * scale + shift

            # --- Mish: x * tanh(softplus(x)); tanh(softplus(x)) = t/(t+2)
            #     with t = e^x*(e^x+2).  Exact divide (accuracy) — the
            #     minimum() clamp alone handles the large-x overflow branch.
            e = jnp.exp(jnp.minimum(yn, _MISH_THRESH))
            t = e * (e + 2.0)
            out = yn * (t / (t + 2.0))

            o_ref[s] = out.astype(o_ref.dtype)
            return carry

        if batch_block == 1:
            body(0, None)
        else:
            lax.fori_loop(0, batch_block, body, None)

    return kernel


def _vmem_policy():
    """(per-step block budget bytes, vmem_limit_bytes, two_core)."""
    default_vmem = 128 * 1024 * 1024
    try:
        info = pltpu.get_tpu_info()
        vmem = int(getattr(info, "vmem_capacity_bytes", default_vmem))
    except Exception:  # e.g. interpret mode / no TPU introspection
        vmem = default_vmem
    if vmem <= 64 * 1024 * 1024:
        # v7x-class: 64 MiB VMEM per TC, 2 TensorCores share the grid.
        return 6 * 1024 * 1024, 40 * 1024 * 1024, True
    # v5e / v6e: 128 MiB VMEM, single TensorCore.
    return 12 * 1024 * 1024, 64 * 1024 * 1024, False


def _pick_batch_block(n, c_in, c_out, length, itemsize, block_budget, two_core):
    """Biggest batch block whose (in + out) bytes fit the per-step budget.

    Single-TC chips (v5e/v6e): as big as the budget allows (fewer, longer
    DMAs -> closer to the HBM roofline).  2-TC chips (v7x): keep >= 2 grid
    steps and prefer an even step count so both TensorCores stay busy.
    """
    per_sample = (c_in + c_out) * length * itemsize
    bb_cap = max(1, block_budget // max(per_sample, 1))
    if two_core and n >= 2:
        bb_cap = min(bb_cap, n // 2)
    bb_cap = max(1, min(bb_cap, n))
    divisors = [d for d in range(1, bb_cap + 1) if n % d == 0]
    if two_core:
        even = [d for d in divisors if (n // d) % 2 == 0]
        if even:
            return max(even)
    return max(divisors)


def conv_gn_mish(x, weight, bias, gamma, beta):
    """Fused kernel_size=1 Conv + GroupNorm(32) + Mish.

    x:      (N, C_in, *spatial)            e.g. (N, C_in, num_points, k)
    weight: (C_out, C_in) or (C_out, C_in, 1, 1)
    bias / gamma / beta: (C_out,)
    returns (N, C_out, *spatial) in x.dtype
    """
    n, c_in = x.shape[0], x.shape[1]
    spatial = x.shape[2:]
    length = 1
    for d in spatial:
        length *= d

    weight = weight.reshape(weight.shape[0], c_in)
    c_out = weight.shape[0]
    assert c_out % NUM_GROUPS == 0, "GroupNorm(32) requires C_out % 32 == 0"
    gs = c_out // NUM_GROUPS

    xf = x.reshape(n, c_in, length)

    # Lane-dense last dim: pad L up to a multiple of 128 so the output block
    # writes with unmasked vst; stats are corrected in-kernel for the padding.
    l_pad = ((length + 127) // 128) * 128
    pad_cols = l_pad - length
    if pad_cols:
        xf = jnp.pad(xf, ((0, 0), (0, 0), (0, pad_cols)))

    # Hoisted out of the kernel body: group average + broadcast matrix with
    # the 1/(group_size * L_real) normalization folded in.
    cid = jnp.arange(c_out) // gs
    gavg = (cid[:, None] == cid[None, :]).astype(jnp.float32) / float(gs * length)

    params = jnp.stack(
        [bias.astype(jnp.float32),
         gamma.astype(jnp.float32),
         beta.astype(jnp.float32)], axis=1)                      # (C_out, 3)

    block_budget, vmem_limit, two_core = _vmem_policy()
    bb = _pick_batch_block(n, c_in, c_out, l_pad, x.dtype.itemsize,
                           block_budget, two_core)

    out = pl.pallas_call(
        _make_kernel(bb, pad_cols),
        out_shape=jax.ShapeDtypeStruct((n, c_out, l_pad), x.dtype),
        grid_spec=pltpu.PrefetchScalarGridSpec(
            num_scalar_prefetch=0,
            grid=(n // bb,),
            in_specs=[
                pl.BlockSpec((bb, c_in, l_pad), lambda i: (i, 0, 0)),
                pl.BlockSpec((c_out, c_in), lambda i: (0, 0)),
                pl.BlockSpec((c_out, c_out), lambda i: (0, 0)),
                pl.BlockSpec((c_out, 3), lambda i: (0, 0)),
            ],
            out_specs=pl.BlockSpec((bb, c_out, l_pad), lambda i: (i, 0, 0)),
        ),
        compiler_params=pltpu.CompilerParams(
            dimension_semantics=("parallel",),
            vmem_limit_bytes=vmem_limit,
        ),
    )(xf, weight, gavg, params)

    if pad_cols:
        out = out[:, :, :length]
    return out.reshape((n, c_out) + spatial)


def _reference(x, weight, bias, gamma, beta):
    """Pure-JAX reference (matches PyTorch Conv2d_k1 + GroupNorm + Mish)."""
    n, c_in = x.shape[0], x.shape[1]
    spatial = x.shape[2:]
    xf = x.reshape(n, c_in, -1).astype(jnp.float32)
    w = weight.reshape(weight.shape[0], c_in).astype(jnp.float32)
    c_out = w.shape[0]
    length = xf.shape[-1]

    y = jnp.einsum("oc,ncl->nol", w, xf) + bias[None, :, None]
    yg = y.reshape(n, NUM_GROUPS, (c_out // NUM_GROUPS) * length)
    mean = yg.mean(-1, keepdims=True)
    var = yg.var(-1, keepdims=True)
    yn = ((yg - mean) / jnp.sqrt(var + GN_EPS)).reshape(n, c_out, length)
    yn = yn * gamma[None, :, None] + beta[None, :, None]
    sp = jnp.where(yn > _MISH_THRESH, yn,
                   jnp.log1p(jnp.exp(jnp.minimum(yn, _MISH_THRESH))))
    return (yn * jnp.tanh(sp)).reshape((n, c_out) + spatial)


def _check(x, weight, bias, gamma, beta, tol=2e-3):
    out = conv_gn_mish(x, weight, bias, gamma, beta)
    out = jax.block_until_ready(out)
    ref = _reference(x, weight, bias, gamma, beta)
    assert out.shape == ref.shape
    err = jnp.max(jnp.abs(out - ref) / (1.0 + jnp.abs(ref)))
    assert err < tol, f"max mixed abs/rel error too large: {err}"
    return out


if __name__ == "__main__":
    # GeoEdgeConv-style shapes: per-point features gathered over k neighbours.
    # Conv2d(in_dims=16, out_dims=64, kernel_size=1, norm='group', bias=True)
    N, C_IN, C_OUT = 2, 16, 64
    NUM_POINTS, K = 32, 16            # spatial dims -> lane length L = 512

    key = jax.random.PRNGKey(0)
    kx, kw, kb, kg, kbe, kx2 = jax.random.split(key, 6)

    x = jax.random.normal(kx, (N, C_IN, NUM_POINTS, K), dtype=jnp.float32)

    bound = 1.0 / (C_IN ** 0.5)       # PyTorch Conv default init range
    weight = jax.random.uniform(kw, (C_OUT, C_IN), jnp.float32, -bound, bound)
    bias = jax.random.uniform(kb, (C_OUT,), jnp.float32, -bound, bound)
    gamma = 1.0 + 0.1 * jax.random.normal(kg, (C_OUT,), jnp.float32)
    beta = 0.05 * jax.random.normal(kbe, (C_OUT,), jnp.float32)

    out = _check(x, weight, bias, gamma, beta)
    assert out.shape == (N, C_OUT, NUM_POINTS, K)

    # Non-128-aligned spatial size exercises the lane-padding + stat-correction
    # path (L = 10*9 = 90 -> padded to 128).
    x2 = jax.random.normal(kx2, (N, C_IN, 10, 9), dtype=jnp.float32)
    out2 = _check(x2, weight, bias, gamma, beta)
    assert out2.shape == (N, C_OUT, 10, 9)

    print("KERNEL_OK")
</pallas_src>

<mosaic_0001>
module attributes {stable_mosaic.version = 11 : i64} {
  func.func @kernel(%arg0: i32, %arg1: memref<2x16x512xf32, #tpu.memory_space<vmem>>, %arg2: memref<64x16xf32, #tpu.memory_space<vmem>>, %arg3: memref<64x64xf32, #tpu.memory_space<vmem>>, %arg4: memref<64x3xf32, #tpu.memory_space<vmem>>, %arg5: memref<2x64x512xf32, #tpu.memory_space<vmem>>) attributes {dimension_semantics = [#tpu.dimension_semantics<parallel>], iteration_bounds = array<i64: 1>, scalar_prefetch = 0 : i64, scratch_operands = 0 : i64, tpu.core_type = #tpu.core_type<tc>, window_params = [{transform_indices = @transform_0, window_bounds = array<i64: 2, 16, 512>}, {pipeline_mode = #tpu.pipeline_mode<synchronous>, transform_indices = @transform_1, window_bounds = array<i64: 64, 16>}, {pipeline_mode = #tpu.pipeline_mode<synchronous>, transform_indices = @transform_2, window_bounds = array<i64: 64, 64>}, {pipeline_mode = #tpu.pipeline_mode<synchronous>, transform_indices = @transform_3, window_bounds = array<i64: 64, 3>}, {transform_indices = @transform_4, window_bounds = array<i64: 2, 64, 512>}]} {
    %c0 = arith.constant 0 : index
    %c0_0 = arith.constant 0 : index
    %0 = vector.load %arg2[%c0, %c0_0] : memref<64x16xf32, #tpu.memory_space<vmem>>, vector<64x16xf32>
    %c0_1 = arith.constant 0 : index
    %c0_2 = arith.constant 0 : index
    %1 = vector.load %arg3[%c0_1, %c0_2] : memref<64x64xf32, #tpu.memory_space<vmem>>, vector<64x64xf32>
    %c0_3 = arith.constant 0 : index
    %c0_4 = arith.constant 0 : index
    %2 = vector.load %arg4[%c0_3, %c0_4] : memref<64x3xf32, #tpu.memory_space<vmem>>, vector<64x3xf32>
    %3 = vector.extract_strided_slice %2 {offsets = [0, 0], sizes = [64, 1], strides = [1, 1]} : vector<64x3xf32> to vector<64x1xf32>
    %4 = vector.extract_strided_slice %2 {offsets = [0, 1], sizes = [64, 1], strides = [1, 1]} : vector<64x3xf32> to vector<64x1xf32>
    %5 = vector.extract_strided_slice %2 {offsets = [0, 2], sizes = [64, 1], strides = [1, 1]} : vector<64x3xf32> to vector<64x1xf32>
    %c0_i32 = arith.constant 0 : i32
    %c2_i32 = arith.constant 2 : i32
    %6 = arith.addi %c0_i32, %c2_i32 : i32
    %c1_i32 = arith.constant 1 : i32
    scf.for %arg6 = %c0_i32 to %6 step %c1_i32  : i32 {
      %7 = arith.index_cast %arg6 : i32 to index
      %c0_6 = arith.constant 0 : index
      %c0_7 = arith.constant 0 : index
      %8 = vector.load %arg1[%7, %c0_6, %c0_7] : memref<2x16x512xf32, #tpu.memory_space<vmem>>, vector<1x16x512xf32>
      %9 = vector.shape_cast %8 : vector<1x16x512xf32> to vector<16x512xf32>
      %cst = arith.constant dense<0.000000e+00> : vector<64x512xf32>
      %10 = tpu.matmul %0, %9, %cst {dimension_numbers = #tpu.dot_dimension_numbers<[1], [0], [0], [1], [0, 0, 1, 1], [], []>} : vector<64x16xf32>, vector<16x512xf32>, vector<64x512xf32> -> vector<64x512xf32>
      %11 = vector.broadcast %3 : vector<64x1xf32> to vector<64x512xf32>
      %12 = arith.addf %10, %11 : vector<64x512xf32>
      %cst_8 = arith.constant dense<0.000000e+00> : vector<64xf32>
      %13 = vector.multi_reduction <add>, %12, %cst_8 [1] : vector<64x512xf32> to vector<64xf32>
      %14 = vector.shape_cast %13 : vector<64xf32> to vector<64x1xf32>
      %15 = arith.mulf %12, %12 : vector<64x512xf32>
      %cst_9 = arith.constant dense<0.000000e+00> : vector<64xf32>
      %16 = vector.multi_reduction <add>, %15, %cst_9 [1] : vector<64x512xf32> to vector<64xf32>
      %17 = vector.shape_cast %16 : vector<64xf32> to vector<64x1xf32>
      %18 = tpu.concatenate %14, %17 in 1 : vector<64x1xf32>, vector<64x1xf32> -> vector<64x2xf32>
      %cst_10 = arith.constant dense<0.000000e+00> : vector<64x2xf32>
      %19 = tpu.matmul %1, %18, %cst_10 {dimension_numbers = #tpu.dot_dimension_numbers<[1], [0], [0], [1], [0, 0, 1, 1], [], []>} : vector<64x64xf32>, vector<64x2xf32>, vector<64x2xf32> -> vector<64x2xf32>
      %20 = vector.extract_strided_slice %19 {offsets = [0, 0], sizes = [64, 1], strides = [1, 1]} : vector<64x2xf32> to vector<64x1xf32>
      %21 = vector.extract_strided_slice %19 {offsets = [0, 1], sizes = [64, 1], strides = [1, 1]} : vector<64x2xf32> to vector<64x1xf32>
      %22 = arith.mulf %20, %20 : vector<64x1xf32>
      %23 = arith.subf %21, %22 : vector<64x1xf32>
      %cst_11 = arith.constant 0.000000e+00 : f32
      %24 = vector.broadcast %cst_11 : f32 to vector<64x1xf32>
      %25 = arith.maximumf %23, %24 : vector<64x1xf32>
      %cst_12 = arith.constant 9.99999974E-6 : f32
      %26 = vector.broadcast %cst_12 : f32 to vector<64x1xf32>
      %27 = arith.addf %25, %26 : vector<64x1xf32>
      %28 = math.rsqrt %27 : vector<64x1xf32>
      %29 = arith.mulf %4, %28 : vector<64x1xf32>
      %30 = arith.mulf %20, %29 : vector<64x1xf32>
      %31 = arith.subf %5, %30 : vector<64x1xf32>
      %32 = vector.broadcast %29 : vector<64x1xf32> to vector<64x512xf32>
      %33 = arith.mulf %12, %32 : vector<64x512xf32>
      %34 = vector.broadcast %31 : vector<64x1xf32> to vector<64x512xf32>
      %35 = arith.addf %33, %34 : vector<64x512xf32>
      %cst_13 = arith.constant 2.000000e+01 : f32
      %36 = vector.broadcast %cst_13 : f32 to vector<64x512xf32>
      %37 = arith.minimumf %35, %36 : vector<64x512xf32>
      %38 = math.exp %37 : vector<64x512xf32>
      %cst_14 = arith.constant 2.000000e+00 : f32
      %39 = vector.broadcast %cst_14 : f32 to vector<64x512xf32>
      %40 = arith.addf %38, %39 : vector<64x512xf32>
      %41 = arith.mulf %38, %40 : vector<64x512xf32>
      %cst_15 = arith.constant 2.000000e+00 : f32
      %42 = vector.broadcast %cst_15 : f32 to vector<64x512xf32>
      %43 = arith.addf %41, %42 : vector<64x512xf32>
      %44 = arith.divf %41, %43 : vector<64x512xf32>
      %45 = arith.mulf %35, %44 : vector<64x512xf32>
      %46 = arith.index_cast %arg6 : i32 to index
      %c0_16 = arith.constant 0 : index
      %c0_17 = arith.constant 0 : index
      %47 = vector.load %arg5[%46, %c0_16, %c0_17] : memref<2x64x512xf32, #tpu.memory_space<vmem>>, vector<1x64x512xf32>
      %48 = vector.shape_cast %47 : vector<1x64x512xf32> to vector<64x512xf32>
      %49 = vector.shape_cast %45 : vector<64x512xf32> to vector<1x64x512xf32>
      tpu.vector_store %arg5[%46, %c0_16, %c0_17], %49 {strides = array<i32>} : memref<2x64x512xf32, #tpu.memory_space<vmem>>, vector<1x64x512xf32>,
    }
    %c2_i32_5 = arith.constant 2 : i32
    return
  }
  func.func @transform_0(%arg0: i32) -> (i32, i32, i32) {
    %c0_i32 = arith.constant 0 : i32
    %c0_i32_0 = arith.constant 0 : i32
    %c0_i32_1 = arith.constant 0 : i32
    return %arg0, %c0_i32, %c0_i32_0 : i32, i32, i32
  }
  func.func @transform_1(%arg0: i32) -> (i32, i32) {
    %c0_i32 = arith.constant 0 : i32
    %c0_i32_0 = arith.constant 0 : i32
    %c0_i32_1 = arith.constant 0 : i32
    return %c0_i32, %c0_i32_0 : i32, i32
  }
  func.func @transform_2(%arg0: i32) -> (i32, i32) {
    %c0_i32 = arith.constant 0 : i32
    %c0_i32_0 = arith.constant 0 : i32
    %c0_i32_1 = arith.constant 0 : i32
    return %c0_i32, %c0_i32_0 : i32, i32
  }
  func.func @transform_3(%arg0: i32) -> (i32, i32) {
    %c0_i32 = arith.constant 0 : i32
    %c0_i32_0 = arith.constant 0 : i32
    %c0_i32_1 = arith.constant 0 : i32
    return %c0_i32, %c0_i32_0 : i32, i32
  }
  func.func @transform_4(%arg0: i32) -> (i32, i32, i32) {
    %c0_i32 = arith.constant 0 : i32
    %c0_i32_0 = arith.constant 0 : i32
    %c0_i32_1 = arith.constant 0 : i32
    return %arg0, %c0_i32, %c0_i32_0 : i32, i32, i32
  }
}

</mosaic_0001>

<llo_original>
// kernel: tpu_custom_call.1
$region0: #{tpu_custom_call.1}
  #allocation0 [shape = 'u32[]', space=smem, size = 0x4, offset = 0x4, fixed_abs, tag = 'smem constant byte address 0x4 - core index']
  #allocation1 [shape = 'u32[72,128]{1,0:T(1,128)}', space=vmem, size = 0x9000, scoped, tag = 'internal scratch']
  %s0 = inlined_call_operand.vmem [shape: f32[2,16,512], index: 0, kind: input, shape index: {}]
  %s1 = inlined_call_operand.vmem [shape: f32[64,16], index: 1, kind: input, shape index: {}]
  %s2 = inlined_call_operand.hbm [shape: f32[64,64], index: 2, kind: input, shape index: {}]
  %s3 = inlined_call_operand.vmem [shape: f32[64,3], index: 3, kind: input, shape index: {}]
  %s4 = inlined_call_operand.hbm [shape: f32[2,64,512], index: 4, kind: output, shape index: {}]
  %s5 = sld [smem:[#allocation0]]
  $region37: #{tpu_custom_call.1} parent=0
    _
  %s7 = ssub.s32 1, %s5
  %s8 = scalar_select 0, %s7, %s5
  $region1: #{tpu_custom_call.1} parent=0
    #allocation2 [shape = 'u8[32768]{0}', space=vmem, size = 0x8000, scoped, tag = 'input window, operand 2, single buffered']
    #allocation3 [shape = 's32[1]{0}', space=sflag, size = 0x4, scoped, tag = 'scoped memory for tpu_custom_call.1']
    #allocation4 [shape = 's32[1]{0}', space=sflag, size = 0x4, scoped, tag = 'scoped memory for tpu_custom_call.1']
    #allocation5 [shape = 'u8[262144]{0}', space=vmem, size = 0x40000, scoped, tag = 'output window, operand 0, single buffered']
    %9 = vsyncpa [#allocation3], 0
    %10 = vsyncpa [#allocation4], 0
    // Predicated region
    $region2: #{tpu_custom_call.1} parent=1 // pred_check
      _
    $region3: #{tpu_custom_call.1} parent=1 // pred_check_branch
      %12 = sbr.rel (0) target = $region5
    $region4: #{tpu_custom_call.1} parent=1 // pred_region
      _
    $region5: #{tpu_custom_call.1} parent=1 // pred_fallthru
      _
    // Predicated region
    $region6: #{tpu_custom_call.1} parent=1 // pred_check
      _
    $region7: #{tpu_custom_call.1} parent=1 // pred_check_branch
      %14 = sbr.rel (0) target = $region9
    $region8: #{tpu_custom_call.1} parent=1 // pred_region
      _
    $region9: #{tpu_custom_call.1} parent=1 // pred_fallthru
      _
    // Predicated region
    $region10: #{tpu_custom_call.1} parent=1 // pred_check
      _
    $region11: #{tpu_custom_call.1} parent=1 // pred_check_branch
      %16 = sbr.rel (0) target = $region13
    $region12: #{tpu_custom_call.1} parent=1 // pred_region
      %18 = vsyncadd [#allocation3], 0
      %s19 = sshll.u32 %s2, 4
      %s20 = int_to_ptr.hbm [resolvable:$true] %s19
      %s21 = sshll.u32 [#allocation2], 4
      %s22 = int_to_ptr.vmem [resolvable:$true] %s21
      %27 = dma.hbm_to_vmem [thread:$0]  %s20, 1024, %s22, [#allocation3], 128, 128, 8
    $region13: #{tpu_custom_call.1} parent=1 // pred_fallthru
      _
    // Predicated region
    $region14: #{tpu_custom_call.1} parent=1 // pred_check
      _
    $region15: #{tpu_custom_call.1} parent=1 // pred_check_branch
      %29 = sbr.rel (0) target = $region17
    $region16: #{tpu_custom_call.1} parent=1 // pred_region
      _
    $region17: #{tpu_custom_call.1} parent=1 // pred_fallthru
      _
    // Predicated region
    $region18: #{tpu_custom_call.1} parent=1 // pred_check
      _
    $region19: #{tpu_custom_call.1} parent=1 // pred_check_branch
      %31 = sbr.rel (0) target = $region21
    $region20: #{tpu_custom_call.1} parent=1 // pred_region
      %33 = dma.done [#allocation3], 1024
    $region21: #{tpu_custom_call.1} parent=1 // pred_fallthru
      _
    %v34 = vld [vmem:[%s1] sm:$0xff]
    %v35 = vld [vmem:[%s1 + $0x8] sm:$0xff]
    %v36 = vld [vmem:[%s1 + $0x10] sm:$0xff]
    %v37 = vld [vmem:[%s1 + $0x18] sm:$0xff]
    %v38 = vld [vmem:[%s1 + $0x20] sm:$0xff]
    %v39 = vld [vmem:[%s1 + $0x28] sm:$0xff]
    %v40 = vld [vmem:[%s1 + $0x30] sm:$0xff]
    %v41 = vld [vmem:[%s1 + $0x38] sm:$0xff]
    %v42 = vld [vmem:[#allocation2] sm:$0xff]
    %v43 = vld [vmem:[#allocation2 + $0x8] sm:$0xff]
    %v44 = vld [vmem:[#allocation2 + $0x10] sm:$0xff]
    %v45 = vld [vmem:[#allocation2 + $0x18] sm:$0xff]
    %v46 = vld [vmem:[#allocation2 + $0x20] sm:$0xff]
    %v47 = vld [vmem:[#allocation2 + $0x28] sm:$0xff]
    %v48 = vld [vmem:[#allocation2 + $0x30] sm:$0xff]
    %v49 = vld [vmem:[#allocation2 + $0x38] sm:$0xff]
    %v50 = vld [vmem:[%s3] sm:$0xff]
    %v51 = vld [vmem:[%s3 + $0x8] sm:$0xff]
    %v52 = vld [vmem:[%s3 + $0x10] sm:$0xff]
    %v53 = vld [vmem:[%s3 + $0x18] sm:$0xff]
    %v54 = vld [vmem:[%s3 + $0x20] sm:$0xff]
    %v55 = vld [vmem:[%s3 + $0x28] sm:$0xff]
    %v56 = vld [vmem:[%s3 + $0x30] sm:$0xff]
    %v57 = vld [vmem:[%s3 + $0x38] sm:$0xff]
    loop: start=0, step=1, limit=2
    $region22: #{tpu_custom_call.1} parent=1 // loop_pre_header
      _
    $region23: #{tpu_custom_call.1} parent=1 // loop_header
      %s59 = sphi 0, %s63
      %p60 = scmp.ge.s32.totalorder %s59, 2
    $region24: #{tpu_custom_call.1} parent=1 // loop_header_branch
      %62 = sbr.rel (%p60) target = $region28
    $region25: #{tpu_custom_call.1} parent=1 // loop_body
      %s64 = smul.u32 %s59, 8
      %s65 = smul.addr %s64, 8
      %s66 = scalar_lea.vmem %s0, %s65
      %v67 = vld [vmem:[%s66] sm:$0xff]
      %v68 = vld [vmem:[%s66 + $0x8] sm:$0xff]
      %v69 = vld [vmem:[%s66 + $0x10] sm:$0xff]
      %v70 = vld [vmem:[%s66 + $0x18] sm:$0xff]
      %v71 = vld [vmem:[%s66 + $0x20] sm:$0xff]
      %v72 = vld [vmem:[%s66 + $0x28] sm:$0xff]
      %v73 = vld [vmem:[%s66 + $0x30] sm:$0xff]
      %v74 = vld [vmem:[%s66 + $0x38] sm:$0xff]
      %76 = vset.pattern.permute.xlu0 0
      %77 = vperm.xlu0 %76, %v50
      %v78 = vpop.permute.xlu0 %77
      %81 = vset.pattern.permute.xlu0 0
      %82 = vperm.xlu0 %81, %v51
      %v83 = vpop.permute.xlu0 %82
      %86 = vset.pattern.permute.xlu0 0
      %87 = vperm.xlu0 %86, %v52
      %v88 = vpop.permute.xlu0 %87
      %91 = vset.pattern.permute.xlu0 0
      %92 = vperm.xlu0 %91, %v53
      %v93 = vpop.permute.xlu0 %92
      %96 = vset.pattern.permute.xlu0 0
      %97 = vperm.xlu0 %96, %v54
      %v98 = vpop.permute.xlu0 %97
      %101 = vset.pattern.permute.xlu0 0
      %102 = vperm.xlu0 %101, %v55
      %v103 = vpop.permute.xlu0 %102
      %106 = vset.pattern.permute.xlu0 0
      %107 = vperm.xlu0 %106, %v56
      %v108 = vpop.permute.xlu0 %107
      %111 = vset.pattern.permute.xlu0 0
      %112 = vperm.xlu0 %111, %v57
      %v113 = vpop.permute.xlu0 %112
      %vm115 = vcmask 130048
      %v117 = vsel %vm115, %v34, 0
      %v120 = vsel %vm115, %v35, 0
      %v123 = vsel %vm115, %v36, 0
      %v126 = vsel %vm115, %v37, 0
      %v129 = vsel %vm115, %v38, 0
      %v132 = vsel %vm115, %v39, 0
      %v135 = vsel %vm115, %v40, 0
      %v138 = vsel %vm115, %v41, 0
      %140 = vmatpush.msra.mxu0 0.0
      %141 = vmatpush.msra.mxu0 0.0
      %142 = vmatpush.msra.mxu0 0.0
      %143 = vmatpush.msra.mxu0 0.0
      %144 = vmatpush.msra.mxu0 0.0
      %145 = vmatpush.msra.mxu0 0.0
      %146 = vmatpush.msra.mxu0 0.0
      %147 = vmatpush.msra.mxu0 0.0
      %148 = vmatpush.msra.mxu0 0.0
      %149 = vmatpush.msra.mxu0 0.0
      %150 = vmatpush.msra.mxu0 0.0
      %151 = vmatpush.msra.mxu0 0.0
      %152 = vmatpush.msra.mxu0 0.0
      %153 = vmatpush.msra.mxu0 0.0
      %154 = vmatpush.msra.mxu0 %v71
      %155 = vmatpush.msra.mxu0 %v67
      %156 = vmatmul.f32.gmra.mxu0 %v117
      %v157 = vpop.f32.mrf.mxu0
      %v158 = vadd.f32 %v78, %v157
      %159 = vmatmul.f32.gmra.mxu0 %v120
      %v160 = vpop.f32.mrf.mxu0
      %v161 = vadd.f32 %v83, %v160
      %162 = vmatmul.f32.gmra.mxu0 %v123
      %v163 = vpop.f32.mrf.mxu0
      %v164 = vadd.f32 %v88, %v163
      %165 = vmatmul.f32.gmra.mxu0 %v126
      %v166 = vpop.f32.mrf.mxu0
      %v167 = vadd.f32 %v93, %v166
      %168 = vmatmul.f32.gmra.mxu0 %v129
      %v169 = vpop.f32.mrf.mxu0
      %v170 = vadd.f32 %v98, %v169
      %171 = vmatmul.f32.gmra.mxu0 %v132
      %v172 = vpop.f32.mrf.mxu0
      %v173 = vadd.f32 %v103, %v172
      %174 = vmatmul.f32.gmra.mxu0 %v135
      %v175 = vpop.f32.mrf.mxu0
      %v176 = vadd.f32 %v108, %v175
      %177 = vmatmul.f32.gmra.mxu0 %v138
      %v178 = vpop.f32.mrf.mxu0
      %v179 = vadd.f32 %v113, %v178
      %180 = vdwg.mxu0
      %181 = vmatpush.msra.mxu0 0.0
      %182 = vmatpush.msra.mxu0 0.0
      %183 = vmatpush.msra.mxu0 0.0
      %184 = vmatpush.msra.mxu0 0.0
      %185 = vmatpush.msra.mxu0 0.0
      %186 = vmatpush.msra.mxu0 0.0
      %187 = vmatpush.msra.mxu0 0.0
      %188 = vmatpush.msra.mxu0 0.0
      %189 = vmatpush.msra.mxu0 0.0
      %190 = vmatpush.msra.mxu0 0.0
      %191 = vmatpush.msra.mxu0 0.0
      %192 = vmatpush.msra.mxu0 0.0
      %193 = vmatpush.msra.mxu0 0.0
      %194 = vmatpush.msra.mxu0 0.0
      %195 = vmatpush.msra.mxu0 %v72
      %196 = vmatpush.msra.mxu0 %v68
      %197 = vmatmul.f32.gmra.mxu0 %v117
      %v198 = vpop.f32.mrf.mxu0
      %v199 = vadd.f32 %v78, %v198
      %200 = vmatmul.f32.gmra.mxu0 %v120
      %v201 = vpop.f32.mrf.mxu0
      %v202 = vadd.f32 %v83, %v201
      %203 = vmatmul.f32.gmra.mxu0 %v123
      %v204 = vpop.f32.mrf.mxu0
      %v205 = vadd.f32 %v88, %v204
      %206 = vmatmul.f32.gmra.mxu0 %v126
      %v207 = vpop.f32.mrf.mxu0
      %v208 = vadd.f32 %v93, %v207
      %209 = vmatmul.f32.gmra.mxu0 %v129
      %v210 = vpop.f32.mrf.mxu0
      %v211 = vadd.f32 %v98, %v210
      %212 = vmatmul.f32.gmra.mxu0 %v132
      %v213 = vpop.f32.mrf.mxu0
      %v214 = vadd.f32 %v103, %v213
      %215 = vmatmul.f32.gmra.mxu0 %v135
      %v216 = vpop.f32.mrf.mxu0
      %v217 = vadd.f32 %v108, %v216
      %218 = vmatmul.f32.gmra.mxu0 %v138
      %v219 = vpop.f32.mrf.mxu0
      %v220 = vadd.f32 %v113, %v219
      %221 = vdwg.mxu0
      %222 = vmatpush.msra.mxu0 0.0
      %223 = vmatpush.msra.mxu0 0.0
      %224 = vmatpush.msra.mxu0 0.0
      %225 = vmatpush.msra.mxu0 0.0
      %226 = vmatpush.msra.mxu0 0.0
      %227 = vmatpush.msra.mxu0 0.0
      %228 = vmatpush.msra.mxu0 0.0
      %229 = vmatpush.msra.mxu0 0.0
      %230 = vmatpush.msra.mxu0 0.0
      %231 = vmatpush.msra.mxu0 0.0
      %232 = vmatpush.msra.mxu0 0.0
      %233 = vmatpush.msra.mxu0 0.0
      %234 = vmatpush.msra.mxu0 0.0
      %235 = vmatpush.msra.mxu0 0.0
      %236 = vmatpush.msra.mxu0 %v73
      %237 = vmatpush.msra.mxu0 %v69
      %238 = vmatmul.f32.gmra.mxu0 %v117
      %v239 = vpop.f32.mrf.mxu0
      %v240 = vadd.f32 %v78, %v239
      %241 = vmatmul.f32.gmra.mxu0 %v120
      %v242 = vpop.f32.mrf.mxu0
      %v243 = vadd.f32 %v83, %v242
      %244 = vmatmul.f32.gmra.mxu0 %v123
      %v245 = vpop.f32.mrf.mxu0
      %v246 = vadd.f32 %v88, %v245
      %247 = vmatmul.f32.gmra.mxu0 %v126
      %v248 = vpop.f32.mrf.mxu0
      %v249 = vadd.f32 %v93, %v248
      %250 = vmatmul.f32.gmra.mxu0 %v129
      %v251 = vpop.f32.mrf.mxu0
      %v252 = vadd.f32 %v98, %v251
      %253 = vmatmul.f32.gmra.mxu0 %v132
      %v254 = vpop.f32.mrf.mxu0
      %v255 = vadd.f32 %v103, %v254
      %256 = vmatmul.f32.gmra.mxu0 %v135
      %v257 = vpop.f32.mrf.mxu0
      %v258 = vadd.f32 %v108, %v257
      %259 = vmatmul.f32.gmra.mxu0 %v138
      %v260 = vpop.f32.mrf.mxu0
      %v261 = vadd.f32 %v113, %v260
      %262 = vdwg.mxu0
      %263 = vmatpush.msra.mxu0 0.0
      %264 = vmatpush.msra.mxu0 0.0
      %265 = vmatpush.msra.mxu0 0.0
      %266 = vmatpush.msra.mxu0 0.0
      %267 = vmatpush.msra.mxu0 0.0
      %268 = vmatpush.msra.mxu0 0.0
      %269 = vmatpush.msra.mxu0 0.0
      %270 = vmatpush.msra.mxu0 0.0
      %271 = vmatpush.msra.mxu0 0.0
      %272 = vmatpush.msra.mxu0 0.0
      %273 = vmatpush.msra.mxu0 0.0
      %274 = vmatpush.msra.mxu0 0.0
      %275 = vmatpush.msra.mxu0 0.0
      %276 = vmatpush.msra.mxu0 0.0
      %277 = vmatpush.msra.mxu0 %v74
      %278 = vmatpush.msra.mxu0 %v70
      %279 = vmatmul.f32.gmra.mxu0 %v117
      %v280 = vpop.f32.mrf.mxu0
      %v281 = vadd.f32 %v78, %v280
      %282 = vmatmul.f32.gmra.mxu0 %v120
      %v283 = vpop.f32.mrf.mxu0
      %v284 = vadd.f32 %v83, %v283
      %285 = vmatmul.f32.gmra.mxu0 %v123
      %v286 = vpop.f32.mrf.mxu0
      %v287 = vadd.f32 %v88, %v286
      %288 = vmatmul.f32.gmra.mxu0 %v126
      %v289 = vpop.f32.mrf.mxu0
      %v290 = vadd.f32 %v93, %v289
      %291 = vmatmul.f32.gmra.mxu0 %v129
      %v292 = vpop.f32.mrf.mxu0
      %v293 = vadd.f32 %v98, %v292
      %294 = vmatmul.f32.gmra.mxu0 %v132
      %v295 = vpop.f32.mrf.mxu0
      %v296 = vadd.f32 %v103, %v295
      %297 = vmatmul.f32.gmra.mxu0 %v135
      %v298 = vpop.f32.mrf.mxu0
      %v299 = vadd.f32 %v108, %v298
      %300 = vmatmul.f32.gmra.mxu0 %v138
      %v301 = vpop.f32.mrf.mxu0
      %v302 = vadd.f32 %v113, %v301
      %303 = vdwg.mxu0
      %v304 = vadd.f32 %v158, %v199
      %v305 = vadd.f32 %v304, %v240
      %v306 = vadd.f32 %v305, %v281
      %307 = vadd.xlane.f32.xlu0 %v306
      %v308 = vpop.xlane.xlu0 %307
      %v309 = vadd.f32 %v161, %v202
      %v310 = vadd.f32 %v309, %v243
      %v311 = vadd.f32 %v310, %v284
      %312 = vadd.xlane.f32.xlu0 %v311
      %v313 = vpop.xlane.xlu0 %312
      %v314 = vadd.f32 %v164, %v205
      %v315 = vadd.f32 %v314, %v246
      %v316 = vadd.f32 %v315, %v287
      %317 = vadd.xlane.f32.xlu0 %v316
      %v318 = vpop.xlane.xlu0 %317
      %v319 = vadd.f32 %v167, %v208
      %v320 = vadd.f32 %v319, %v249
      %v321 = vadd.f32 %v320, %v290
      %322 = vadd.xlane.f32.xlu0 %v321
      %v323 = vpop.xlane.xlu0 %322
      %v324 = vadd.f32 %v170, %v211
      %v325 = vadd.f32 %v324, %v252
      %v326 = vadd.f32 %v325, %v293
      %327 = vadd.xlane.f32.xlu0 %v326
      %v328 = vpop.xlane.xlu0 %327
      %v329 = vadd.f32 %v173, %v214
      %v330 = vadd.f32 %v329, %v255
      %v331 = vadd.f32 %v330, %v296
      %332 = vadd.xlane.f32.xlu0 %v331
      %v333 = vpop.xlane.xlu0 %332
      %v334 = vadd.f32 %v176, %v217
      %v335 = vadd.f32 %v334, %v258
      %v336 = vadd.f32 %v335, %v299
      %337 = vadd.xlane.f32.xlu0 %v336
      %v338 = vpop.xlane.xlu0 %337
      %v339 = vadd.f32 %v179, %v220
      %v340 = vadd.f32 %v339, %v261
      %v341 = vadd.f32 %v340, %v302
      %342 = vadd.xlane.f32.xlu0 %v341
      %v343 = vpop.xlane.xlu0 %342
      %v344 = vmul.f32 %v158, %v158
      %v345 = vmul.f32 %v199, %v199
      %v346 = vmul.f32 %v240, %v240
      %v347 = vmul.f32 %v281, %v281
      %v348 = vmul.f32 %v161, %v161
      %v349 = vmul.f32 %v202, %v202
      %v350 = vmul.f32 %v243, %v243
      %v351 = vmul.f32 %v284, %v284
      %v352 = vmul.f32 %v164, %v164
      %v353 = vmul.f32 %v205, %v205
      %v354 = vmul.f32 %v246, %v246
      %v355 = vmul.f32 %v287, %v287
      %v356 = vmul.f32 %v167, %v167
      %v357 = vmul.f32 %v208, %v208
      %v358 = vmul.f32 %v249, %v249
      %v359 = vmul.f32 %v290, %v290
      %v360 = vmul.f32 %v170, %v170
      %v361 = vmul.f32 %v211, %v211
      %v362 = vmul.f32 %v252, %v252
      %v363 = vmul.f32 %v293, %v293
      %v364 = vmul.f32 %v173, %v173
      %v365 = vmul.f32 %v214, %v214
      %v366 = vmul.f32 %v255, %v255
      %v367 = vmul.f32 %v296, %v296
      %v368 = vmul.f32 %v176, %v176
      %v369 = vmul.f32 %v217, %v217
      %v370 = vmul.f32 %v258, %v258
      %v371 = vmul.f32 %v299, %v299
      %v372 = vmul.f32 %v179, %v179
      %v373 = vmul.f32 %v220, %v220
      %v374 = vmul.f32 %v261, %v261
      %v375 = vmul.f32 %v302, %v302
      %v376 = vadd.f32 %v344, %v345
      %v377 = vadd.f32 %v376, %v346
      %v378 = vadd.f32 %v377, %v347
      %379 = vadd.xlane.f32.xlu0 %v378
      %v380 = vpop.xlane.xlu0 %379
      %v381 = vadd.f32 %v348, %v349
      %v382 = vadd.f32 %v381, %v350
      %v383 = vadd.f32 %v382, %v351
      %384 = vadd.xlane.f32.xlu0 %v383
      %v385 = vpop.xlane.xlu0 %384
      %v386 = vadd.f32 %v352, %v353
      %v387 = vadd.f32 %v386, %v354
      %v388 = vadd.f32 %v387, %v355
      %389 = vadd.xlane.f32.xlu0 %v388
      %v390 = vpop.xlane.xlu0 %389
      %v391 = vadd.f32 %v356, %v357
      %v392 = vadd.f32 %v391, %v358
      %v393 = vadd.f32 %v392, %v359
      %394 = vadd.xlane.f32.xlu0 %v393
      %v395 = vpop.xlane.xlu0 %394
      %v396 = vadd.f32 %v360, %v361
      %v397 = vadd.f32 %v396, %v362
      %v398 = vadd.f32 %v397, %v363
      %399 = vadd.xlane.f32.xlu0 %v398
      %v400 = vpop.xlane.xlu0 %399
      %v401 = vadd.f32 %v364, %v365
      %v402 = vadd.f32 %v401, %v366
      %v403 = vadd.f32 %v402, %v367
      %404 = vadd.xlane.f32.xlu0 %v403
      %v405 = vpop.xlane.xlu0 %404
      %v406 = vadd.f32 %v368, %v369
      %v407 = vadd.f32 %v406, %v370
      %v408 = vadd.f32 %v407, %v371
      %409 = vadd.xlane.f32.xlu0 %v408
      %v410 = vpop.xlane.xlu0 %409
      %v411 = vadd.f32 %v372, %v373
      %v412 = vadd.f32 %v411, %v374
      %v413 = vadd.f32 %v412, %v375
      %414 = vadd.xlane.f32.xlu0 %v413
      %v415 = vpop.xlane.xlu0 %414
      %vm416 = vcmask 7168
      %v417 = vsel %vm416, %v308, %v380
      %v418 = vsel %vm416, %v313, %v385
      %v419 = vsel %vm416, %v318, %v390
      %v420 = vsel %vm416, %v323, %v395
      %v421 = vsel %vm416, %v328, %v400
      %v422 = vsel %vm416, %v333, %v405
      %v423 = vsel %vm416, %v338, %v410
      %v424 = vsel %vm416, %v343, %v415
      %vm425 = vcmask 523264
      %v427 = vsel %vm425, %v42, 0
      %v430 = vsel %vm425, %v43, 0
      %v433 = vsel %vm425, %v44, 0
      %v436 = vsel %vm425, %v45, 0
      %v439 = vsel %vm425, %v46, 0
      %v442 = vsel %vm425, %v47, 0
      %v445 = vsel %vm425, %v48, 0
      %v448 = vsel %vm425, %v49, 0
      %450 = vmatpush.msra.mxu0 0.0
      %451 = vmatpush.msra.mxu0 0.0
      %452 = vmatpush.msra.mxu0 0.0
      %453 = vmatpush.msra.mxu0 0.0
      %454 = vmatpush.msra.mxu0 0.0
      %455 = vmatpush.msra.mxu0 0.0
      %456 = vmatpush.msra.mxu0 0.0
      %457 = vmatpush.msra.mxu0 0.0
      %458 = vmatpush.msra.mxu0 %v424
      %459 = vmatpush.msra.mxu0 %v423
      %460 = vmatpush.msra.mxu0 %v422
      %461 = vmatpush.msra.mxu0 %v421
      %462 = vmatpush.msra.mxu0 %v420
      %463 = vmatpush.msra.mxu0 %v419
      %464 = vmatpush.msra.mxu0 %v418
      %465 = vmatpush.msra.mxu0 %v417
      %466 = vmatmul.f32.gmra.mxu0 %v427
      %v467 = vpop.f32.mrf.mxu0
      %v468 = vadd.f32 0.0, %v467
      %469 = vmatmul.f32.gmra.mxu0 %v430
      %v470 = vpop.f32.mrf.mxu0
      %v471 = vadd.f32 0.0, %v470
      %472 = vmatmul.f32.gmra.mxu0 %v433
      %v473 = vpop.f32.mrf.mxu0
      %v474 = vadd.f32 0.0, %v473
      %475 = vmatmul.f32.gmra.mxu0 %v436
      %v476 = vpop.f32.mrf.mxu0
      %v477 = vadd.f32 0.0, %v476
      %478 = vmatmul.f32.gmra.mxu0 %v439
      %v479 = vpop.f32.mrf.mxu0
      %v480 = vadd.f32 0.0, %v479
      %481 = vmatmul.f32.gmra.mxu0 %v442
      %v482 = vpop.f32.mrf.mxu0
      %v483 = vadd.f32 0.0, %v482
      %484 = vmatmul.f32.gmra.mxu0 %v445
      %v485 = vpop.f32.mrf.mxu0
      %v486 = vadd.f32 0.0, %v485
      %487 = vmatmul.f32.gmra.mxu0 %v448
      %v488 = vpop.f32.mrf.mxu0
      %v489 = vadd.f32 0.0, %v488
      %490 = vdwg.mxu0
      %v491 = vmul.f32 %v468, %v468
      %v492 = vmul.f32 %v471, %v471
      %v493 = vmul.f32 %v474, %v474
      %v494 = vmul.f32 %v477, %v477
      %v495 = vmul.f32 %v480, %v480
      %v496 = vmul.f32 %v483, %v483
      %v497 = vmul.f32 %v486, %v486
      %v498 = vmul.f32 %v489, %v489
      %507 = vrot.lane.b32.xlu0 %v491, 1
      %v508 = vpop.permute.xlu0 %507
      %509 = vrot.lane.b32.xlu0 %v492, 1
      %v510 = vpop.permute.xlu0 %509
      %511 = vrot.lane.b32.xlu0 %v493, 1
      %v512 = vpop.permute.xlu0 %511
      %513 = vrot.lane.b32.xlu0 %v494, 1
      %v514 = vpop.permute.xlu0 %513
      %515 = vrot.lane.b32.xlu0 %v495, 1
      %v516 = vpop.permute.xlu0 %515
      %517 = vrot.lane.b32.xlu0 %v496, 1
      %v518 = vpop.permute.xlu0 %517
      %519 = vrot.lane.b32.xlu0 %v497, 1
      %v520 = vpop.permute.xlu0 %519
      %521 = vrot.lane.b32.xlu0 %v498, 1
      %v522 = vpop.permute.xlu0 %521
      %v531 = vsub.f32 %v468, %v508
      %v532 = vsub.f32 %v471, %v510
      %v533 = vsub.f32 %v474, %v512
      %v534 = vsub.f32 %v477, %v514
      %v535 = vsub.f32 %v480, %v516
      %v536 = vsub.f32 %v483, %v518
      %v537 = vsub.f32 %v486, %v520
      %v538 = vsub.f32 %v489, %v522
      %v539 = vmax.f32 %v531, 0.0
      %v540 = vmax.f32 %v532, 0.0
      %v541 = vmax.f32 %v533, 0.0
      %v542 = vmax.f32 %v534, 0.0
      %v543 = vmax.f32 %v535, 0.0
      %v544 = vmax.f32 %v536, 0.0
      %v545 = vmax.f32 %v537, 0.0
      %v546 = vmax.f32 %v538, 0.0
      %v547 = vadd.f32 %v539, 1e-05
      %v548 = vadd.f32 %v540, 1e-05
      %v549 = vadd.f32 %v541, 1e-05
      %v550 = vadd.f32 %v542, 1e-05
      %v551 = vadd.f32 %v543, 1e-05
      %v552 = vadd.f32 %v544, 1e-05
      %v553 = vadd.f32 %v545, 1e-05
      %v554 = vadd.f32 %v546, 1e-05
      %v555 = vrsqrt.pop %v547
      %v556 = vmul.f32 %v555, %v547
      %v557 = vmul.f32 %v556, %v555
      %v558 = vmul.f32 0.5, %v557
      %v559 = vsub.f32 1.5, %v558
      %v560 = vmul.f32 %v555, %v559
      %vm561 = vweird.f32 %v547
      %vm562 = vweird.f32 %v555
      %vm563 = vmor %vm561, %vm562
      %v564 = vsel %vm563, %v555, %v560
      %v565 = vrsqrt.pop %v548
      %v566 = vmul.f32 %v565, %v548
      %v567 = vmul.f32 %v566, %v565
      %v568 = vmul.f32 0.5, %v567
      %v569 = vsub.f32 1.5, %v568
      %v570 = vmul.f32 %v565, %v569
      %vm571 = vweird.f32 %v548
      %vm572 = vweird.f32 %v565
      %vm573 = vmor %vm571, %vm572
      %v574 = vsel %vm573, %v565, %v570
      %v575 = vrsqrt.pop %v549
      %v576 = vmul.f32 %v575, %v549
      %v577 = vmul.f32 %v576, %v575
      %v578 = vmul.f32 0.5, %v577
      %v579 = vsub.f32 1.5, %v578
      %v580 = vmul.f32 %v575, %v579
      %vm581 = vweird.f32 %v549
      %vm582 = vweird.f32 %v575
      %vm583 = vmor %vm581, %vm582
      %v584 = vsel %vm583, %v575, %v580
      %v585 = vrsqrt.pop %v550
      %v586 = vmul.f32 %v585, %v550
      %v587 = vmul.f32 %v586, %v585
      %v588 = vmul.f32 0.5, %v587
      %v589 = vsub.f32 1.5, %v588
      %v590 = vmul.f32 %v585, %v589
      %vm591 = vweird.f32 %v550
      %vm592 = vweird.f32 %v585
      %vm593 = vmor %vm591, %vm592
      %v594 = vsel %vm593, %v585, %v590
      %v595 = vrsqrt.pop %v551
      %v596 = vmul.f32 %v595, %v551
      %v597 = vmul.f32 %v596, %v595
      %v598 = vmul.f32 0.5, %v597
      %v599 = vsub.f32 1.5, %v598
      %v600 = vmul.f32 %v595, %v599
      %vm601 = vweird.f32 %v551
      %vm602 = vweird.f32 %v595
      %vm603 = vmor %vm601, %vm602
      %v604 = vsel %vm603, %v595, %v600
      %v605 = vrsqrt.pop %v552
      %v606 = vmul.f32 %v605, %v552
      %v607 = vmul.f32 %v606, %v605
      %v608 = vmul.f32 0.5, %v607
      %v609 = vsub.f32 1.5, %v608
      %v610 = vmul.f32 %v605, %v609
      %vm611 = vweird.f32 %v552
      %vm612 = vweird.f32 %v605
      %vm613 = vmor %vm611, %vm612
      %v614 = vsel %vm613, %v605, %v610
      %v615 = vrsqrt.pop %v553
      %v616 = vmul.f32 %v615, %v553
      %v617 = vmul.f32 %v616, %v615
      %v618 = vmul.f32 0.5, %v617
      %v619 = vsub.f32 1.5, %v618
      %v620 = vmul.f32 %v615, %v619
      %vm621 = vweird.f32 %v553
      %vm622 = vweird.f32 %v615
      %vm623 = vmor %vm621, %vm622
      %v624 = vsel %vm623, %v615, %v620
      %v625 = vrsqrt.pop %v554
      %v626 = vmul.f32 %v625, %v554
      %v627 = vmul.f32 %v626, %v625
      %v628 = vmul.f32 0.5, %v627
      %v629 = vsub.f32 1.5, %v628
      %v630 = vmul.f32 %v625, %v629
      %vm631 = vweird.f32 %v554
      %vm632 = vweird.f32 %v625
      %vm633 = vmor %vm631, %vm632
      %v634 = vsel %vm633, %v625, %v630
      %v635 = vmul.f32 %v50, %v564
      %v636 = vmul.f32 %v51, %v574
      %v637 = vmul.f32 %v52, %v584
      %v638 = vmul.f32 %v53, %v594
      %v639 = vmul.f32 %v54, %v604
      %v640 = vmul.f32 %v55, %v614
      %v641 = vmul.f32 %v56, %v624
      %v642 = vmul.f32 %v57, %v634
      %651 = vrot.lane.b32.xlu0 %v635, 127
      %v652 = vpop.permute.xlu0 %651
      %653 = vrot.lane.b32.xlu0 %v636, 127
      %v654 = vpop.permute.xlu0 %653
      %655 = vrot.lane.b32.xlu0 %v637, 127
      %v656 = vpop.permute.xlu0 %655
      %657 = vrot.lane.b32.xlu0 %v638, 127
      %v658 = vpop.permute.xlu0 %657
      %659 = vrot.lane.b32.xlu0 %v639, 127
      %v660 = vpop.permute.xlu0 %659
      %661 = vrot.lane.b32.xlu0 %v640, 127
      %v662 = vpop.permute.xlu0 %661
      %663 = vrot.lane.b32.xlu0 %v641, 127
      %v664 = vpop.permute.xlu0 %663
      %665 = vrot.lane.b32.xlu0 %v642, 127
      %v666 = vpop.permute.xlu0 %665
      %v675 = vmul.f32 %v468, %v652
      %v676 = vmul.f32 %v471, %v654
      %v677 = vmul.f32 %v474, %v656
      %v678 = vmul.f32 %v477, %v658
      %v679 = vmul.f32 %v480, %v660
      %v680 = vmul.f32 %v483, %v662
      %v681 = vmul.f32 %v486, %v664
      %v682 = vmul.f32 %v489, %v666
      %691 = vrot.lane.b32.xlu0 %v675, 2
      %v692 = vpop.permute.xlu0 %691
      %693 = vrot.lane.b32.xlu0 %v676, 2
      %v694 = vpop.permute.xlu0 %693
      %695 = vrot.lane.b32.xlu0 %v677, 2
      %v696 = vpop.permute.xlu0 %695
      %697 = vrot.lane.b32.xlu0 %v678, 2
      %v698 = vpop.permute.xlu0 %697
      %699 = vrot.lane.b32.xlu0 %v679, 2
      %v700 = vpop.permute.xlu0 %699
      %701 = vrot.lane.b32.xlu0 %v680, 2
      %v702 = vpop.permute.xlu0 %701
      %703 = vrot.lane.b32.xlu0 %v681, 2
      %v704 = vpop.permute.xlu0 %703
      %705 = vrot.lane.b32.xlu0 %v682, 2
      %v706 = vpop.permute.xlu0 %705
      %v715 = vsub.f32 %v50, %v692
      %v716 = vsub.f32 %v51, %v694
      %v717 = vsub.f32 %v52, %v696
      %v718 = vsub.f32 %v53, %v698
      %v719 = vsub.f32 %v54, %v700
      %v720 = vsub.f32 %v55, %v702
      %v721 = vsub.f32 %v56, %v704
      %v722 = vsub.f32 %v57, %v706
      %723 = vset.pattern.permute.xlu0 1
      %724 = vperm.xlu0 %723, %v635
      %v725 = vpop.permute.xlu0 %724
      %727 = vset.pattern.permute.xlu0 1
      %728 = vperm.xlu0 %727, %v636
      %v729 = vpop.permute.xlu0 %728
      %731 = vset.pattern.permute.xlu0 1
      %732 = vperm.xlu0 %731, %v637
      %v733 = vpop.permute.xlu0 %732
      %735 = vset.pattern.permute.xlu0 1
      %736 = vperm.xlu0 %735, %v638
      %v737 = vpop.permute.xlu0 %736
      %739 = vset.pattern.permute.xlu0 1
      %740 = vperm.xlu0 %739, %v639
      %v741 = vpop.permute.xlu0 %740
      %743 = vset.pattern.permute.xlu0 1
      %744 = vperm.xlu0 %743, %v640
      %v745 = vpop.permute.xlu0 %744
      %747 = vset.pattern.permute.xlu0 1
      %748 = vperm.xlu0 %747, %v641
      %v749 = vpop.permute.xlu0 %748
      %751 = vset.pattern.permute.xlu0 1
      %752 = vperm.xlu0 %751, %v642
      %v753 = vpop.permute.xlu0 %752
      %v755 = vmul.f32 %v158, %v725
      %v756 = vmul.f32 %v199, %v725
      %v757 = vmul.f32 %v240, %v725
      %v758 = vmul.f32 %v281, %v725
      %v759 = vmul.f32 %v161, %v729
      %v760 = vmul.f32 %v202, %v729
      %v761 = vmul.f32 %v243, %v729
      %v762 = vmul.f32 %v284, %v729
      %v763 = vmul.f32 %v164, %v733
      %v764 = vmul.f32 %v205, %v733
      %v765 = vmul.f32 %v246, %v733
      %v766 = vmul.f32 %v287, %v733
      %v767 = vmul.f32 %v167, %v737
      %v768 = vmul.f32 %v208, %v737
      %v769 = vmul.f32 %v249, %v737
      %v770 = vmul.f32 %v290, %v737
      %v771 = vmul.f32 %v170, %v741
      %v772 = vmul.f32 %v211, %v741
      %v773 = vmul.f32 %v252, %v741
      %v774 = vmul.f32 %v293, %v741
      %v775 = vmul.f32 %v173, %v745
      %v776 = vmul.f32 %v214, %v745
      %v777 = vmul.f32 %v255, %v745
      %v778 = vmul.f32 %v296, %v745
      %v779 = vmul.f32 %v176, %v749
      %v780 = vmul.f32 %v217, %v749
      %v781 = vmul.f32 %v258, %v749
      %v782 = vmul.f32 %v299, %v749
      %v783 = vmul.f32 %v179, %v753
      %v784 = vmul.f32 %v220, %v753
      %v785 = vmul.f32 %v261, %v753
      %v786 = vmul.f32 %v302, %v753
      %788 = vset.pattern.permute.xlu0 2
      %789 = vperm.xlu0 %788, %v715
      %v790 = vpop.permute.xlu0 %789
      %793 = vset.pattern.permute.xlu0 2
      %794 = vperm.xlu0 %793, %v716
      %v795 = vpop.permute.xlu0 %794
      %798 = vset.pattern.permute.xlu0 2
      %799 = vperm.xlu0 %798, %v717
      %v800 = vpop.permute.xlu0 %799
      %803 = vset.pattern.permute.xlu0 2
      %804 = vperm.xlu0 %803, %v718
      %v805 = vpop.permute.xlu0 %804
      %808 = vset.pattern.permute.xlu0 2
      %809 = vperm.xlu0 %808, %v719
      %v810 = vpop.permute.xlu0 %809
      %813 = vset.pattern.permute.xlu0 2
      %814 = vperm.xlu0 %813, %v720
      %v815 = vpop.permute.xlu0 %814
      %818 = vset.pattern.permute.xlu0 2
      %819 = vperm.xlu0 %818, %v721
      %v820 = vpop.permute.xlu0 %819
      %823 = vset.pattern.permute.xlu0 2
      %824 = vperm.xlu0 %823, %v722
      %v825 = vpop.permute.xlu0 %824
      %v827 = vadd.f32 %v755, %v790
      %v828 = vadd.f32 %v756, %v790
      %v829 = vadd.f32 %v757, %v790
      %v830 = vadd.f32 %v758, %v790
      %v831 = vadd.f32 %v759, %v795
      %v832 = vadd.f32 %v760, %v795
      %v833 = vadd.f32 %v761, %v795
      %v834 = vadd.f32 %v762, %v795
      %v835 = vadd.f32 %v763, %v800
      %v836 = vadd.f32 %v764, %v800
      %v837 = vadd.f32 %v765, %v800
      %v838 = vadd.f32 %v766, %v800
      %v839 = vadd.f32 %v767, %v805
      %v840 = vadd.f32 %v768, %v805
      %v841 = vadd.f32 %v769, %v805
      %v842 = vadd.f32 %v770, %v805
      %v843 = vadd.f32 %v771, %v810
      %v844 = vadd.f32 %v772, %v810
      %v845 = vadd.f32 %v773, %v810
      %v846 = vadd.f32 %v774, %v810
      %v847 = vadd.f32 %v775, %v815
      %v848 = vadd.f32 %v776, %v815
      %v849 = vadd.f32 %v777, %v815
      %v850 = vadd.f32 %v778, %v815
      %v851 = vadd.f32 %v779, %v820
      %v852 = vadd.f32 %v780, %v820
      %v853 = vadd.f32 %v781, %v820
      %v854 = vadd.f32 %v782, %v820
      %v855 = vadd.f32 %v783, %v825
      %v856 = vadd.f32 %v784, %v825
      %v857 = vadd.f32 %v785, %v825
      %v858 = vadd.f32 %v786, %v825
      %v859 = vmin.f32 %v827, 20.0
      %v860 = vmin.f32 %v828, 20.0
      %v861 = vmin.f32 %v829, 20.0
      %v862 = vmin.f32 %v830, 20.0
      %v863 = vmin.f32 %v831, 20.0
      %v864 = vmin.f32 %v832, 20.0
      %v865 = vmin.f32 %v833, 20.0
      %v866 = vmin.f32 %v834, 20.0
      %v867 = vmin.f32 %v835, 20.0
      %v868 = vmin.f32 %v836, 20.0
      %v869 = vmin.f32 %v837, 20.0
      %v870 = vmin.f32 %v838, 20.0
      %v871 = vmin.f32 %v839, 20.0
      %v872 = vmin.f32 %v840, 20.0
      %v873 = vmin.f32 %v841, 20.0
      %v874 = vmin.f32 %v842, 20.0
      %v875 = vmin.f32 %v843, 20.0
      %v876 = vmin.f32 %v844, 20.0
      %v877 = vmin.f32 %v845, 20.0
      %v878 = vmin.f32 %v846, 20.0
      %v879 = vmin.f32 %v847, 20.0
      %v880 = vmin.f32 %v848, 20.0
      %v881 = vmin.f32 %v849, 20.0
      %v882 = vmin.f32 %v850, 20.0
      %v883 = vmin.f32 %v851, 20.0
      %v884 = vmin.f32 %v852, 20.0
      %v885 = vmin.f32 %v853, 20.0
      %v886 = vmin.f32 %v854, 20.0
      %v887 = vmin.f32 %v855, 20.0
      %v888 = vmin.f32 %v856, 20.0
      %v889 = vmin.f32 %v857, 20.0
      %v890 = vmin.f32 %v858, 20.0
      %v891 = vmul.f32 %v859, 1.442695
      %v892 = vpow.pop %v891
      %v893 = vmul.f32 %v860, 1.442695
      %v894 = vpow.pop %v893
      %v895 = vmul.f32 %v861, 1.442695
      %v896 = vpow.pop %v895
      %v897 = vmul.f32 %v862, 1.442695
      %v898 = vpow.pop %v897
      %v899 = vmul.f32 %v863, 1.442695
      %v900 = vpow.pop %v899
      %v901 = vmul.f32 %v864, 1.442695
      %v902 = vpow.pop %v901
      %v903 = vmul.f32 %v865, 1.442695
      %v904 = vpow.pop %v903
      %v905 = vmul.f32 %v866, 1.442695
      %v906 = vpow.pop %v905
      %v907 = vmul.f32 %v867, 1.442695
      %v908 = vpow.pop %v907
      %v909 = vmul.f32 %v868, 1.442695
      %v910 = vpow.pop %v909
      %v911 = vmul.f32 %v869, 1.442695
      %v912 = vpow.pop %v911
      %v913 = vmul.f32 %v870, 1.442695
      %v914 = vpow.pop %v913
      %v915 = vmul.f32 %v871, 1.442695
      %v916 = vpow.pop %v915
      %v917 = vmul.f32 %v872, 1.442695
      %v918 = vpow.pop %v917
      %v919 = vmul.f32 %v873, 1.442695
      %v920 = vpow.pop %v919
      %v921 = vmul.f32 %v874, 1.442695
      %v922 = vpow.pop %v921
      %v923 = vmul.f32 %v875, 1.442695
      %v924 = vpow.pop %v923
      %v925 = vmul.f32 %v876, 1.442695
      %v926 = vpow.pop %v925
      %v927 = vmul.f32 %v877, 1.442695
      %v928 = vpow.pop %v927
      %v929 = vmul.f32 %v878, 1.442695
      %v930 = vpow.pop %v929
      %v931 = vmul.f32 %v879, 1.442695
      %v932 = vpow.pop %v931
      %v933 = vmul.f32 %v880, 1.442695
      %v934 = vpow.pop %v933
      %v935 = vmul.f32 %v881, 1.442695
      %v936 = vpow.pop %v935
      %v937 = vmul.f32 %v882, 1.442695
      %v938 = vpow.pop %v937
      %v939 = vmul.f32 %v883, 1.442695
      %v940 = vpow.pop %v939
      %v941 = vmul.f32 %v884, 1.442695
      %v942 = vpow.pop %v941
      %v943 = vmul.f32 %v885, 1.442695
      %v944 = vpow.pop %v943
      %v945 = vmul.f32 %v886, 1.442695
      %v946 = vpow.pop %v945
      %v947 = vmul.f32 %v887, 1.442695
      %v948 = vpow.pop %v947
      %v949 = vmul.f32 %v888, 1.442695
      %v950 = vpow.pop %v949
      %v951 = vmul.f32 %v889, 1.442695
      %v952 = vpow.pop %v951
      %v953 = vmul.f32 %v890, 1.442695
      %v954 = vpow.pop %v953
      %v955 = vadd.f32 %v892, 2.0
      %v956 = vadd.f32 %v894, 2.0
      %v957 = vadd.f32 %v896, 2.0
      %v958 = vadd.f32 %v898, 2.0
      %v959 = vadd.f32 %v900, 2.0
      %v960 = vadd.f32 %v902, 2.0
      %v961 = vadd.f32 %v904, 2.0
      %v962 = vadd.f32 %v906, 2.0
      %v963 = vadd.f32 %v908, 2.0
      %v964 = vadd.f32 %v910, 2.0
      %v965 = vadd.f32 %v912, 2.0
      %v966 = vadd.f32 %v914, 2.0
      %v967 = vadd.f32 %v916, 2.0
      %v968 = vadd.f32 %v918, 2.0
      %v969 = vadd.f32 %v920, 2.0
      %v970 = vadd.f32 %v922, 2.0
      %v971 = vadd.f32 %v924, 2.0
      %v972 = vadd.f32 %v926, 2.0
      %v973 = vadd.f32 %v928, 2.0
      %v974 = vadd.f32 %v930, 2.0
      %v975 = vadd.f32 %v932, 2.0
      %v976 = vadd.f32 %v934, 2.0
      %v977 = vadd.f32 %v936, 2.0
      %v978 = vadd.f32 %v938, 2.0
      %v979 = vadd.f32 %v940, 2.0
      %v980 = vadd.f32 %v942, 2.0
      %v981 = vadd.f32 %v944, 2.0
      %v982 = vadd.f32 %v946, 2.0
      %v983 = vadd.f32 %v948, 2.0
      %v984 = vadd.f32 %v950, 2.0
      %v985 = vadd.f32 %v952, 2.0
      %v986 = vadd.f32 %v954, 2.0
      %v987 = vmul.f32 %v892, %v955
      %v988 = vmul.f32 %v894, %v956
      %v989 = vmul.f32 %v896, %v957
      %v990 = vmul.f32 %v898, %v958
      %v991 = vmul.f32 %v900, %v959
      %v992 = vmul.f32 %v902, %v960
      %v993 = vmul.f32 %v904, %v961
      %v994 = vmul.f32 %v906, %v962
      %v995 = vmul.f32 %v908, %v963
      %v996 = vmul.f32 %v910, %v964
      %v997 = vmul.f32 %v912, %v965
      %v998 = vmul.f32 %v914, %v966
      %v999 = vmul.f32 %v916, %v967
      %v1000 = vmul.f32 %v918, %v968
      %v1001 = vmul.f32 %v920, %v969
      %v1002 = vmul.f32 %v922, %v970
      %v1003 = vmul.f32 %v924, %v971
      %v1004 = vmul.f32 %v926, %v972
      %v1005 = vmul.f32 %v928, %v973
      %v1006 = vmul.f32 %v930, %v974
      %v1007 = vmul.f32 %v932, %v975
      %v1008 = vmul.f32 %v934, %v976
      %v1009 = vmul.f32 %v936, %v977
      %v1010 = vmul.f32 %v938, %v978
      %v1011 = vmul.f32 %v940, %v979
      %v1012 = vmul.f32 %v942, %v980
      %v1013 = vmul.f32 %v944, %v981
      %v1014 = vmul.f32 %v946, %v982
      %v1015 = vmul.f32 %v948, %v983
      %v1016 = vmul.f32 %v950, %v984
      %v1017 = vmul.f32 %v952, %v985
      %v1018 = vmul.f32 %v954, %v986
      %v1019 = vadd.f32 %v987, 2.0
      %v1020 = vadd.f32 %v988, 2.0
      %v1021 = vadd.f32 %v989, 2.0
      %v1022 = vadd.f32 %v990, 2.0
      %v1023 = vadd.f32 %v991, 2.0
      %v1024 = vadd.f32 %v992, 2.0
      %v1025 = vadd.f32 %v993, 2.0
      %v1026 = vadd.f32 %v994, 2.0
      %v1027 = vadd.f32 %v995, 2.0
      %v1028 = vadd.f32 %v996, 2.0
      %v1029 = vadd.f32 %v997, 2.0
      %v1030 = vadd.f32 %v998, 2.0
      %v1031 = vadd.f32 %v999, 2.0
      %v1032 = vadd.f32 %v1000, 2.0
      %v1033 = vadd.f32 %v1001, 2.0
      %v1034 = vadd.f32 %v1002, 2.0
      %v1035 = vadd.f32 %v1003, 2.0
      %v1036 = vadd.f32 %v1004, 2.0
      %v1037 = vadd.f32 %v1005, 2.0
      %v1038 = vadd.f32 %v1006, 2.0
      %v1039 = vadd.f32 %v1007, 2.0
      %v1040 = vadd.f32 %v1008, 2.0
      %v1041 = vadd.f32 %v1009, 2.0
      %v1042 = vadd.f32 %v1010, 2.0
      %v1043 = vadd.f32 %v1011, 2.0
      %v1044 = vadd.f32 %v1012, 2.0
      %v1045 = vadd.f32 %v1013, 2.0
      %v1046 = vadd.f32 %v1014, 2.0
      %v1047 = vadd.f32 %v1015, 2.0
      %v1048 = vadd.f32 %v1016, 2.0
      %v1049 = vadd.f32 %v1017, 2.0
      %v1050 = vadd.f32 %v1018, 2.0
      %v1051 = vrcp.pop %v1019
      %v1052 = vmul.f32 %v1019, %v1051
      %v1053 = vsub.f32 1.0, %v1052
      %v1054 = vmul.f32 %v1051, %v1053
      %v1055 = vadd.f32 %v1051, %v1054
      %vm1056 = vweird.f32 %v1019
      %vm1057 = vweird.f32 %v1051
      %vm1058 = vmor %vm1056, %vm1057
      %v1059 = vsel %vm1058, %v1051, %v1055
      %v1060 = vand.u32 2147483647, %v1019
      %vm1061 = vcmp.eq.f32.partialorder %v1060, 8.507059e+37
      %v1062 = vand.u32 %v1019, 2147483648
      %v1063 = vor.u32 1.1754944e-38, %v1062
      %v1064 = vsel %vm1061, %v1063, %v1059
      %v1065 = vmul.f32 %v987, %v1064
      %v1066 = vrcp.pop %v1020
      %v1067 = vmul.f32 %v1020, %v1066
      %v1068 = vsub.f32 1.0, %v1067
      %v1069 = vmul.f32 %v1066, %v1068
      %v1070 = vadd.f32 %v1066, %v1069
      %vm1071 = vweird.f32 %v1020
      %vm1072 = vweird.f32 %v1066
      %vm1073 = vmor %vm1071, %vm1072
      %v1074 = vsel %vm1073, %v1066, %v1070
      %v1075 = vand.u32 2147483647, %v1020
      %vm1076 = vcmp.eq.f32.partialorder %v1075, 8.507059e+37
      %v1077 = vand.u32 %v1020, 2147483648
      %v1078 = vor.u32 1.1754944e-38, %v1077
      %v1079 = vsel %vm1076, %v1078, %v1074
      %v1080 = vmul.f32 %v988, %v1079
      %v1081 = vrcp.pop %v1021
      %v1082 = vmul.f32 %v1021, %v1081
      %v1083 = vsub.f32 1.0, %v1082
      %v1084 = vmul.f32 %v1081, %v1083
      %v1085 = vadd.f32 %v1081, %v1084
      %vm1086 = vweird.f32 %v1021
      %vm1087 = vweird.f32 %v1081
      %vm1088 = vmor %vm1086, %vm1087
      %v1089 = vsel %vm1088, %v1081, %v1085
      %v1090 = vand.u32 2147483647, %v1021
      %vm1091 = vcmp.eq.f32.partialorder %v1090, 8.507059e+37
      %v1092 = vand.u32 %v1021, 2147483648
      %v1093 = vor.u32 1.1754944e-38, %v1092
      %v1094 = vsel %vm1091, %v1093, %v1089
      %v1095 = vmul.f32 %v989, %v1094
      %v1096 = vrcp.pop %v1022
      %v1097 = vmul.f32 %v1022, %v1096
      %v1098 = vsub.f32 1.0, %v1097
      %v1099 = vmul.f32 %v1096, %v1098
      %v1100 = vadd.f32 %v1096, %v1099
      %vm1101 = vweird.f32 %v1022
      %vm1102 = vweird.f32 %v1096
      %vm1103 = vmor %vm1101, %vm1102
      %v1104 = vsel %vm1103, %v1096, %v1100
      %v1105 = vand.u32 2147483647, %v1022
      %vm1106 = vcmp.eq.f32.partialorder %v1105, 8.507059e+37
      %v1107 = vand.u32 %v1022, 2147483648
      %v1108 = vor.u32 1.1754944e-38, %v1107
      %v1109 = vsel %vm1106, %v1108, %v1104
      %v1110 = vmul.f32 %v990, %v1109
      %v1111 = vrcp.pop %v1023
      %v1112 = vmul.f32 %v1023, %v1111
      %v1113 = vsub.f32 1.0, %v1112
      %v1114 = vmul.f32 %v1111, %v1113
      %v1115 = vadd.f32 %v1111, %v1114
      %vm1116 = vweird.f32 %v1023
      %vm1117 = vweird.f32 %v1111
      %vm1118 = vmor %vm1116, %vm1117
      %v1119 = vsel %vm1118, %v1111, %v1115
      %v1120 = vand.u32 2147483647, %v1023
      %vm1121 = vcmp.eq.f32.partialorder %v1120, 8.507059e+37
      %v1122 = vand.u32 %v1023, 2147483648
      %v1123 = vor.u32 1.1754944e-38, %v1122
      %v1124 = vsel %vm1121, %v1123, %v1119
      %v1125 = vmul.f32 %v991, %v1124
      %v1126 = vrcp.pop %v1024
      %v1127 = vmul.f32 %v1024, %v1126
      %v1128 = vsub.f32 1.0, %v1127
      %v1129 = vmul.f32 %v1126, %v1128
      %v1130 = vadd.f32 %v1126, %v1129
      %vm1131 = vweird.f32 %v1024
      %vm1132 = vweird.f32 %v1126
      %vm1133 = vmor %vm1131, %vm1132
      %v1134 = vsel %vm1133, %v1126, %v1130
      %v1135 = vand.u32 2147483647, %v1024
      %vm1136 = vcmp.eq.f32.partialorder %v1135, 8.507059e+37
      %v1137 = vand.u32 %v1024, 2147483648
      %v1138 = vor.u32 1.1754944e-38, %v1137
      %v1139 = vsel %vm1136, %v1138, %v1134
      %v1140 = vmul.f32 %v992, %v1139
      %v1141 = vrcp.pop %v1025
      %v1142 = vmul.f32 %v1025, %v1141
      %v1143 = vsub.f32 1.0, %v1142
      %v1144 = vmul.f32 %v1141, %v1143
      %v1145 = vadd.f32 %v1141, %v1144
      %vm1146 = vweird.f32 %v1025
      %vm1147 = vweird.f32 %v1141
      %vm1148 = vmor %vm1146, %vm1147
      %v1149 = vsel %vm1148, %v1141, %v1145
      %v1150 = vand.u32 2147483647, %v1025
      %vm1151 = vcmp.eq.f32.partialorder %v1150, 8.507059e+37
      %v1152 = vand.u32 %v1025, 2147483648
      %v1153 = vor.u32 1.1754944e-38, %v1152
      %v1154 = vsel %vm1151, %v1153, %v1149
      %v1155 = vmul.f32 %v993, %v1154
      %v1156 = vrcp.pop %v1026
      %v1157 = vmul.f32 %v1026, %v1156
      %v1158 = vsub.f32 1.0, %v1157
      %v1159 = vmul.f32 %v1156, %v1158
      %v1160 = vadd.f32 %v1156, %v1159
      %vm1161 = vweird.f32 %v1026
      %vm1162 = vweird.f32 %v1156
      %vm1163 = vmor %vm1161, %vm1162
      %v1164 = vsel %vm1163, %v1156, %v1160
      %v1165 = vand.u32 2147483647, %v1026
      %vm1166 = vcmp.eq.f32.partialorder %v1165, 8.507059e+37
      %v1167 = vand.u32 %v1026, 2147483648
      %v1168 = vor.u32 1.1754944e-38, %v1167
      %v1169 = vsel %vm1166, %v1168, %v1164
      %v1170 = vmul.f32 %v994, %v1169
      %v1171 = vrcp.pop %v1027
      %v1172 = vmul.f32 %v1027, %v1171
      %v1173 = vsub.f32 1.0, %v1172
      %v1174 = vmul.f32 %v1171, %v1173
      %v1175 = vadd.f32 %v1171, %v1174
      %vm1176 = vweird.f32 %v1027
      %vm1177 = vweird.f32 %v1171
      %vm1178 = vmor %vm1176, %vm1177
      %v1179 = vsel %vm1178, %v1171, %v1175
      %v1180 = vand.u32 2147483647, %v1027
      %vm1181 = vcmp.eq.f32.partialorder %v1180, 8.507059e+37
      %v1182 = vand.u32 %v1027, 2147483648
      %v1183 = vor.u32 1.1754944e-38, %v1182
      %v1184 = vsel %vm1181, %v1183, %v1179
      %v1185 = vmul.f32 %v995, %v1184
      %v1186 = vrcp.pop %v1028
      %v1187 = vmul.f32 %v1028, %v1186
      %v1188 = vsub.f32 1.0, %v1187
      %v1189 = vmul.f32 %v1186, %v1188
      %v1190 = vadd.f32 %v1186, %v1189
      %vm1191 = vweird.f32 %v1028
      %vm1192 = vweird.f32 %v1186
      %vm1193 = vmor %vm1191, %vm1192
      %v1194 = vsel %vm1193, %v1186, %v1190
      %v1195 = vand.u32 2147483647, %v1028
      %vm1196 = vcmp.eq.f32.partialorder %v1195, 8.507059e+37
      %v1197 = vand.u32 %v1028, 2147483648
      %v1198 = vor.u32 1.1754944e-38, %v1197
      %v1199 = vsel %vm1196, %v1198, %v1194
      %v1200 = vmul.f32 %v996, %v1199
      %v1201 = vrcp.pop %v1029
      %v1202 = vmul.f32 %v1029, %v1201
      %v1203 = vsub.f32 1.0, %v1202
      %v1204 = vmul.f32 %v1201, %v1203
      %v1205 = vadd.f32 %v1201, %v1204
      %vm1206 = vweird.f32 %v1029
      %vm1207 = vweird.f32 %v1201
      %vm1208 = vmor %vm1206, %vm1207
      %v1209 = vsel %vm1208, %v1201, %v1205
      %v1210 = vand.u32 2147483647, %v1029
      %vm1211 = vcmp.eq.f32.partialorder %v1210, 8.507059e+37
      %v1212 = vand.u32 %v1029, 2147483648
      %v1213 = vor.u32 1.1754944e-38, %v1212
      %v1214 = vsel %vm1211, %v1213, %v1209
      %v1215 = vmul.f32 %v997, %v1214
      %v1216 = vrcp.pop %v1030
      %v1217 = vmul.f32 %v1030, %v1216
      %v1218 = vsub.f32 1.0, %v1217
      %v1219 = vmul.f32 %v1216, %v1218
      %v1220 = vadd.f32 %v1216, %v1219
      %vm1221 = vweird.f32 %v1030
      %vm1222 = vweird.f32 %v1216
      %vm1223 = vmor %vm1221, %vm1222
      %v1224 = vsel %vm1223, %v1216, %v1220
      %v1225 = vand.u32 2147483647, %v1030
      %vm1226 = vcmp.eq.f32.partialorder %v1225, 8.507059e+37
      %v1227 = vand.u32 %v1030, 2147483648
      %v1228 = vor.u32 1.1754944e-38, %v1227
      %v1229 = vsel %vm1226, %v1228, %v1224
      %v1230 = vmul.f32 %v998, %v1229
      %v1231 = vrcp.pop %v1031
      %v1232 = vmul.f32 %v1031, %v1231
      %v1233 = vsub.f32 1.0, %v1232
      %v1234 = vmul.f32 %v1231, %v1233
      %v1235 = vadd.f32 %v1231, %v1234
      %vm1236 = vweird.f32 %v1031
      %vm1237 = vweird.f32 %v1231
      %vm1238 = vmor %vm1236, %vm1237
      %v1239 = vsel %vm1238, %v1231, %v1235
      %v1240 = vand.u32 2147483647, %v1031
      %vm1241 = vcmp.eq.f32.partialorder %v1240, 8.507059e+37
      %v1242 = vand.u32 %v1031, 2147483648
      %v1243 = vor.u32 1.1754944e-38, %v1242
      %v1244 = vsel %vm1241, %v1243, %v1239
      %v1245 = vmul.f32 %v999, %v1244
      %v1246 = vrcp.pop %v1032
      %v1247 = vmul.f32 %v1032, %v1246
      %v1248 = vsub.f32 1.0, %v1247
      %v1249 = vmul.f32 %v1246, %v1248
      %v1250 = vadd.f32 %v1246, %v1249
      %vm1251 = vweird.f32 %v1032
      %vm1252 = vweird.f32 %v1246
      %vm1253 = vmor %vm1251, %vm1252
      %v1254 = vsel %vm1253, %v1246, %v1250
      %v1255 = vand.u32 2147483647, %v1032
      %vm1256 = vcmp.eq.f32.partialorder %v1255, 8.507059e+37
      %v1257 = vand.u32 %v1032, 2147483648
      %v1258 = vor.u32 1.1754944e-38, %v1257
      %v1259 = vsel %vm1256, %v1258, %v1254
      %v1260 = vmul.f32 %v1000, %v1259
      %v1261 = vrcp.pop %v1033
      %v1262 = vmul.f32 %v1033, %v1261
      %v1263 = vsub.f32 1.0, %v1262
      %v1264 = vmul.f32 %v1261, %v1263
      %v1265 = vadd.f32 %v1261, %v1264
      %vm1266 = vweird.f32 %v1033
      %vm1267 = vweird.f32 %v1261
      %vm1268 = vmor %vm1266, %vm1267
      %v1269 = vsel %vm1268, %v1261, %v1265
      %v1270 = vand.u32 2147483647, %v1033
      %vm1271 = vcmp.eq.f32.partialorder %v1270, 8.507059e+37
      %v1272 = vand.u32 %v1033, 2147483648
      %v1273 = vor.u32 1.1754944e-38, %v1272
      %v1274 = vsel %vm1271, %v1273, %v1269
      %v1275 = vmul.f32 %v1001, %v1274
      %v1276 = vrcp.pop %v1034
      %v1277 = vmul.f32 %v1034, %v1276
      %v1278 = vsub.f32 1.0, %v1277
      %v1279 = vmul.f32 %v1276, %v1278
      %v1280 = vadd.f32 %v1276, %v1279
      %vm1281 = vweird.f32 %v1034
      %vm1282 = vweird.f32 %v1276
      %vm1283 = vmor %vm1281, %vm1282
      %v1284 = vsel %vm1283, %v1276, %v1280
      %v1285 = vand.u32 2147483647, %v1034
      %vm1286 = vcmp.eq.f32.partialorder %v1285, 8.507059e+37
      %v1287 = vand.u32 %v1034, 2147483648
      %v1288 = vor.u32 1.1754944e-38, %v1287
      %v1289 = vsel %vm1286, %v1288, %v1284
      %v1290 = vmul.f32 %v1002, %v1289
      %v1291 = vrcp.pop %v1035
      %v1292 = vmul.f32 %v1035, %v1291
      %v1293 = vsub.f32 1.0, %v1292
      %v1294 = vmul.f32 %v1291, %v1293
      %v1295 = vadd.f32 %v1291, %v1294
      %vm1296 = vweird.f32 %v1035
      %vm1297 = vweird.f32 %v1291
      %vm1298 = vmor %vm1296, %vm1297
      %v1299 = vsel %vm1298, %v1291, %v1295
      %v1300 = vand.u32 2147483647, %v1035
      %vm1301 = vcmp.eq.f32.partialorder %v1300, 8.507059e+37
      %v1302 = vand.u32 %v1035, 2147483648
      %v1303 = vor.u32 1.1754944e-38, %v1302
      %v1304 = vsel %vm1301, %v1303, %v1299
      %v1305 = vmul.f32 %v1003, %v1304
      %v1306 = vrcp.pop %v1036
      %v1307 = vmul.f32 %v1036, %v1306
      %v1308 = vsub.f32 1.0, %v1307
      %v1309 = vmul.f32 %v1306, %v1308
      %v1310 = vadd.f32 %v1306, %v1309
      %vm1311 = vweird.f32 %v1036
      %vm1312 = vweird.f32 %v1306
      %vm1313 = vmor %vm1311, %vm1312
      %v1314 = vsel %vm1313, %v1306, %v1310
      %v1315 = vand.u32 2147483647, %v1036
      %vm1316 = vcmp.eq.f32.partialorder %v1315, 8.507059e+37
      %v1317 = vand.u32 %v1036, 2147483648
      %v1318 = vor.u32 1.1754944e-38, %v1317
      %v1319 = vsel %vm1316, %v1318, %v1314
      %v1320 = vmul.f32 %v1004, %v1319
      %v1321 = vrcp.pop %v1037
      %v1322 = vmul.f32 %v1037, %v1321
      %v1323 = vsub.f32 1.0, %v1322
      %v1324 = vmul.f32 %v1321, %v1323
      %v1325 = vadd.f32 %v1321, %v1324
      %vm1326 = vweird.f32 %v1037
      %vm1327 = vweird.f32 %v1321
      %vm1328 = vmor %vm1326, %vm1327
      %v1329 = vsel %vm1328, %v1321, %v1325
      %v1330 = vand.u32 2147483647, %v1037
      %vm1331 = vcmp.eq.f32.partialorder %v1330, 8.507059e+37
      %v1332 = vand.u32 %v1037, 2147483648
      %v1333 = vor.u32 1.1754944e-38, %v1332
      %v1334 = vsel %vm1331, %v1333, %v1329
      %v1335 = vmul.f32 %v1005, %v1334
      %v1336 = vrcp.pop %v1038
      %v1337 = vmul.f32 %v1038, %v1336
      %v1338 = vsub.f32 1.0, %v1337
      %v1339 = vmul.f32 %v1336, %v1338
      %v1340 = vadd.f32 %v1336, %v1339
      %vm1341 = vweird.f32 %v1038
      %vm1342 = vweird.f32 %v1336
      %vm1343 = vmor %vm1341, %vm1342
      %v1344 = vsel %vm1343, %v1336, %v1340
      %v1345 = vand.u32 2147483647, %v1038
      %vm1346 = vcmp.eq.f32.partialorder %v1345, 8.507059e+37
      %v1347 = vand.u32 %v1038, 2147483648
      %v1348 = vor.u32 1.1754944e-38, %v1347
      %v1349 = vsel %vm1346, %v1348, %v1344
      %v1350 = vmul.f32 %v1006, %v1349
      %v1351 = vrcp.pop %v1039
      %v1352 = vmul.f32 %v1039, %v1351
      %v1353 = vsub.f32 1.0, %v1352
      %v1354 = vmul.f32 %v1351, %v1353
      %v1355 = vadd.f32 %v1351, %v1354
      %vm1356 = vweird.f32 %v1039
      %vm1357 = vweird.f32 %v1351
      %vm1358 = vmor %vm1356, %vm1357
      %v1359 = vsel %vm1358, %v1351, %v1355
      %v1360 = vand.u32 2147483647, %v1039
      %vm1361 = vcmp.eq.f32.partialorder %v1360, 8.507059e+37
      %v1362 = vand.u32 %v1039, 2147483648
      %v1363 = vor.u32 1.1754944e-38, %v1362
      %v1364 = vsel %vm1361, %v1363, %v1359
      %v1365 = vmul.f32 %v1007, %v1364
      %v1366 = vrcp.pop %v1040
      %v1367 = vmul.f32 %v1040, %v1366
      %v1368 = vsub.f32 1.0, %v1367
      %v1369 = vmul.f32 %v1366, %v1368
      %v1370 = vadd.f32 %v1366, %v1369
      %vm1371 = vweird.f32 %v1040
      %vm1372 = vweird.f32 %v1366
      %vm1373 = vmor %vm1371, %vm1372
      %v1374 = vsel %vm1373, %v1366, %v1370
      %v1375 = vand.u32 2147483647, %v1040
      %vm1376 = vcmp.eq.f32.partialorder %v1375, 8.507059e+37
      %v1377 = vand.u32 %v1040, 2147483648
      %v1378 = vor.u32 1.1754944e-38, %v1377
      %v1379 = vsel %vm1376, %v1378, %v1374
      %v1380 = vmul.f32 %v1008, %v1379
      %v1381 = vrcp.pop %v1041
      %v1382 = vmul.f32 %v1041, %v1381
      %v1383 = vsub.f32 1.0, %v1382
      %v1384 = vmul.f32 %v1381, %v1383
      %v1385 = vadd.f32 %v1381, %v1384
      %vm1386 = vweird.f32 %v1041
      %vm1387 = vweird.f32 %v1381
      %vm1388 = vmor %vm1386, %vm1387
      %v1389 = vsel %vm1388, %v1381, %v1385
      %v1390 = vand.u32 2147483647, %v1041
      %vm1391 = vcmp.eq.f32.partialorder %v1390, 8.507059e+37
      %v1392 = vand.u32 %v1041, 2147483648
      %v1393 = vor.u32 1.1754944e-38, %v1392
      %v1394 = vsel %vm1391, %v1393, %v1389
      %v1395 = vmul.f32 %v1009, %v1394
      %v1396 = vrcp.pop %v1042
      %v1397 = vmul.f32 %v1042, %v1396
      %v1398 = vsub.f32 1.0, %v1397
      %v1399 = vmul.f32 %v1396, %v1398
      %v1400 = vadd.f32 %v1396, %v1399
      %vm1401 = vweird.f32 %v1042
      %vm1402 = vweird.f32 %v1396
      %vm1403 = vmor %vm1401, %vm1402
      %v1404 = vsel %vm1403, %v1396, %v1400
      %v1405 = vand.u32 2147483647, %v1042
      %vm1406 = vcmp.eq.f32.partialorder %v1405, 8.507059e+37
      %v1407 = vand.u32 %v1042, 2147483648
      %v1408 = vor.u32 1.1754944e-38, %v1407
      %v1409 = vsel %vm1406, %v1408, %v1404
      %v1410 = vmul.f32 %v1010, %v1409
      %v1411 = vrcp.pop %v1043
      %v1412 = vmul.f32 %v1043, %v1411
      %v1413 = vsub.f32 1.0, %v1412
      %v1414 = vmul.f32 %v1411, %v1413
      %v1415 = vadd.f32 %v1411, %v1414
      %vm1416 = vweird.f32 %v1043
      %vm1417 = vweird.f32 %v1411
      %vm1418 = vmor %vm1416, %vm1417
      %v1419 = vsel %vm1418, %v1411, %v1415
      %v1420 = vand.u32 2147483647, %v1043
      %vm1421 = vcmp.eq.f32.partialorder %v1420, 8.507059e+37
      %v1422 = vand.u32 %v1043, 2147483648
      %v1423 = vor.u32 1.1754944e-38, %v1422
      %v1424 = vsel %vm1421, %v1423, %v1419
      %v1425 = vmul.f32 %v1011, %v1424
      %v1426 = vrcp.pop %v1044
      %v1427 = vmul.f32 %v1044, %v1426
      %v1428 = vsub.f32 1.0, %v1427
      %v1429 = vmul.f32 %v1426, %v1428
      %v1430 = vadd.f32 %v1426, %v1429
      %vm1431 = vweird.f32 %v1044
      %vm1432 = vweird.f32 %v1426
      %vm1433 = vmor %vm1431, %vm1432
      %v1434 = vsel %vm1433, %v1426, %v1430
      %v1435 = vand.u32 2147483647, %v1044
      %vm1436 = vcmp.eq.f32.partialorder %v1435, 8.507059e+37
      %v1437 = vand.u32 %v1044, 2147483648
      %v1438 = vor.u32 1.1754944e-38, %v1437
      %v1439 = vsel %vm1436, %v1438, %v1434
      %v1440 = vmul.f32 %v1012, %v1439
      %v1441 = vrcp.pop %v1045
      %v1442 = vmul.f32 %v1045, %v1441
      %v1443 = vsub.f32 1.0, %v1442
      %v1444 = vmul.f32 %v1441, %v1443
      %v1445 = vadd.f32 %v1441, %v1444
      %vm1446 = vweird.f32 %v1045
      %vm1447 = vweird.f32 %v1441
      %vm1448 = vmor %vm1446, %vm1447
      %v1449 = vsel %vm1448, %v1441, %v1445
      %v1450 = vand.u32 2147483647, %v1045
      %vm1451 = vcmp.eq.f32.partialorder %v1450, 8.507059e+37
      %v1452 = vand.u32 %v1045, 2147483648
      %v1453 = vor.u32 1.1754944e-38, %v1452
      %v1454 = vsel %vm1451, %v1453, %v1449
      %v1455 = vmul.f32 %v1013, %v1454
      %v1456 = vrcp.pop %v1046
      %v1457 = vmul.f32 %v1046, %v1456
      %v1458 = vsub.f32 1.0, %v1457
      %v1459 = vmul.f32 %v1456, %v1458
      %v1460 = vadd.f32 %v1456, %v1459
      %vm1461 = vweird.f32 %v1046
      %vm1462 = vweird.f32 %v1456
      %vm1463 = vmor %vm1461, %vm1462
      %v1464 = vsel %vm1463, %v1456, %v1460
      %v1465 = vand.u32 2147483647, %v1046
      %vm1466 = vcmp.eq.f32.partialorder %v1465, 8.507059e+37
      %v1467 = vand.u32 %v1046, 2147483648
      %v1468 = vor.u32 1.1754944e-38, %v1467
      %v1469 = vsel %vm1466, %v1468, %v1464
      %v1470 = vmul.f32 %v1014, %v1469
      %v1471 = vrcp.pop %v1047
      %v1472 = vmul.f32 %v1047, %v1471
      %v1473 = vsub.f32 1.0, %v1472
      %v1474 = vmul.f32 %v1471, %v1473
      %v1475 = vadd.f32 %v1471, %v1474
      %vm1476 = vweird.f32 %v1047
      %vm1477 = vweird.f32 %v1471
      %vm1478 = vmor %vm1476, %vm1477
      %v1479 = vsel %vm1478, %v1471, %v1475
      %v1480 = vand.u32 2147483647, %v1047
      %vm1481 = vcmp.eq.f32.partialorder %v1480, 8.507059e+37
      %v1482 = vand.u32 %v1047, 2147483648
      %v1483 = vor.u32 1.1754944e-38, %v1482
      %v1484 = vsel %vm1481, %v1483, %v1479
      %v1485 = vmul.f32 %v1015, %v1484
      %v1486 = vrcp.pop %v1048
      %v1487 = vmul.f32 %v1048, %v1486
      %v1488 = vsub.f32 1.0, %v1487
      %v1489 = vmul.f32 %v1486, %v1488
      %v1490 = vadd.f32 %v1486, %v1489
      %vm1491 = vweird.f32 %v1048
      %vm1492 = vweird.f32 %v1486
      %vm1493 = vmor %vm1491, %vm1492
      %v1494 = vsel %vm1493, %v1486, %v1490
      %v1495 = vand.u32 2147483647, %v1048
      %vm1496 = vcmp.eq.f32.partialorder %v1495, 8.507059e+37
      %v1497 = vand.u32 %v1048, 2147483648
      %v1498 = vor.u32 1.1754944e-38, %v1497
      %v1499 = vsel %vm1496, %v1498, %v1494
      %v1500 = vmul.f32 %v1016, %v1499
      %v1501 = vrcp.pop %v1049
      %v1502 = vmul.f32 %v1049, %v1501
      %v1503 = vsub.f32 1.0, %v1502
      %v1504 = vmul.f32 %v1501, %v1503
      %v1505 = vadd.f32 %v1501, %v1504
      %vm1506 = vweird.f32 %v1049
      %vm1507 = vweird.f32 %v1501
      %vm1508 = vmor %vm1506, %vm1507
      %v1509 = vsel %vm1508, %v1501, %v1505
      %v1510 = vand.u32 2147483647, %v1049
      %vm1511 = vcmp.eq.f32.partialorder %v1510, 8.507059e+37
      %v1512 = vand.u32 %v1049, 2147483648
      %v1513 = vor.u32 1.1754944e-38, %v1512
      %v1514 = vsel %vm1511, %v1513, %v1509
      %v1515 = vmul.f32 %v1017, %v1514
      %v1516 = vrcp.pop %v1050
      %v1517 = vmul.f32 %v1050, %v1516
      %v1518 = vsub.f32 1.0, %v1517
      %v1519 = vmul.f32 %v1516, %v1518
      %v1520 = vadd.f32 %v1516, %v1519
      %vm1521 = vweird.f32 %v1050
      %vm1522 = vweird.f32 %v1516
      %vm1523 = vmor %vm1521, %vm1522
      %v1524 = vsel %vm1523, %v1516, %v1520
      %v1525 = vand.u32 2147483647, %v1050
      %vm1526 = vcmp.eq.f32.partialorder %v1525, 8.507059e+37
      %v1527 = vand.u32 %v1050, 2147483648
      %v1528 = vor.u32 1.1754944e-38, %v1527
      %v1529 = vsel %vm1526, %v1528, %v1524
      %v1530 = vmul.f32 %v1018, %v1529
      %v1531 = vmul.f32 %v827, %v1065
      %v1532 = vmul.f32 %v828, %v1080
      %v1533 = vmul.f32 %v829, %v1095
      %v1534 = vmul.f32 %v830, %v1110
      %v1535 = vmul.f32 %v831, %v1125
      %v1536 = vmul.f32 %v832, %v1140
      %v1537 = vmul.f32 %v833, %v1155
      %v1538 = vmul.f32 %v834, %v1170
      %v1539 = vmul.f32 %v835, %v1185
      %v1540 = vmul.f32 %v836, %v1200
      %v1541 = vmul.f32 %v837, %v1215
      %v1542 = vmul.f32 %v838, %v1230
      %v1543 = vmul.f32 %v839, %v1245
      %v1544 = vmul.f32 %v840, %v1260
      %v1545 = vmul.f32 %v841, %v1275
      %v1546 = vmul.f32 %v842, %v1290
      %v1547 = vmul.f32 %v843, %v1305
      %v1548 = vmul.f32 %v844, %v1320
      %v1549 = vmul.f32 %v845, %v1335
      %v1550 = vmul.f32 %v846, %v1350
      %v1551 = vmul.f32 %v847, %v1365
      %v1552 = vmul.f32 %v848, %v1380
      %v1553 = vmul.f32 %v849, %v1395
      %v1554 = vmul.f32 %v850, %v1410
      %v1555 = vmul.f32 %v851, %v1425
      %v1556 = vmul.f32 %v852, %v1440
      %v1557 = vmul.f32 %v853, %v1455
      %v1558 = vmul.f32 %v854, %v1470
      %v1559 = vmul.f32 %v855, %v1485
      %v1560 = vmul.f32 %v856, %v1500
      %v1561 = vmul.f32 %v857, %v1515
      %v1562 = vmul.f32 %v858, %v1530
      %s1563 = smul.u32 %s59, 32
      %s1564 = smul.addr %s1563, 8
      %s1565 = scalar_lea.vmem [#allocation5], %s1564
      %1566 = vst [vmem:[%s1565] sm:$0xff] %v1531
      %1567 = vst [vmem:[%s1565 + $0x8] sm:$0xff] %v1532
      %1568 = vst [vmem:[%s1565 + $0x10] sm:$0xff] %v1533
      %1569 = vst [vmem:[%s1565 + $0x18] sm:$0xff] %v1534
      %1570 = vst [vmem:[%s1565 + $0x20] sm:$0xff] %v1535
      %1571 = vst [vmem:[%s1565 + $0x28] sm:$0xff] %v1536
      %1572 = vst [vmem:[%s1565 + $0x30] sm:$0xff] %v1537
      %1573 = vst [vmem:[%s1565 + $0x38] sm:$0xff] %v1538
      %1574 = vst [vmem:[%s1565 + $0x40] sm:$0xff] %v1539
      %1575 = vst [vmem:[%s1565 + $0x48] sm:$0xff] %v1540
      %1576 = vst [vmem:[%s1565 + $0x50] sm:$0xff] %v1541
      %1577 = vst [vmem:[%s1565 + $0x58] sm:$0xff] %v1542
      %1578 = vst [vmem:[%s1565 + $0x60] sm:$0xff] %v1543
      %1579 = vst [vmem:[%s1565 + $0x68] sm:$0xff] %v1544
      %1580 = vst [vmem:[%s1565 + $0x70] sm:$0xff] %v1545
      %1581 = vst [vmem:[%s1565 + $0x78] sm:$0xff] %v1546
      %1582 = vst [vmem:[%s1565 + $0x80] sm:$0xff] %v1547
      %1583 = vst [vmem:[%s1565 + $0x88] sm:$0xff] %v1548
      %1584 = vst [vmem:[%s1565 + $0x90] sm:$0xff] %v1549
      %1585 = vst [vmem:[%s1565 + $0x98] sm:$0xff] %v1550
      %1586 = vst [vmem:[%s1565 + $0xa0] sm:$0xff] %v1551
      %1587 = vst [vmem:[%s1565 + $0xa8] sm:$0xff] %v1552
      %1588 = vst [vmem:[%s1565 + $0xb0] sm:$0xff] %v1553
      %1589 = vst [vmem:[%s1565 + $0xb8] sm:$0xff] %v1554
      %1590 = vst [vmem:[%s1565 + $0xc0] sm:$0xff] %v1555
      %1591 = vst [vmem:[%s1565 + $0xc8] sm:$0xff] %v1556
      %1592 = vst [vmem:[%s1565 + $0xd0] sm:$0xff] %v1557
      %1593 = vst [vmem:[%s1565 + $0xd8] sm:$0xff] %v1558
      %1594 = vst [vmem:[%s1565 + $0xe0] sm:$0xff] %v1559
      %1595 = vst [vmem:[%s1565 + $0xe8] sm:$0xff] %v1560
      %1596 = vst [vmem:[%s1565 + $0xf0] sm:$0xff] %v1561
      %1597 = vst [vmem:[%s1565 + $0xf8] sm:$0xff] %v1562
    $region26: #{tpu_custom_call.1} parent=1 // loop_footer
      %s63 = sadd.s32 1, %s59
    $region27: #{tpu_custom_call.1} parent=1 // loop_footer_branch
      %58 = sbr.rel target = $region23
    $region28: #{tpu_custom_call.1} parent=1 // loop_exit
      _
    // Predicated region
    $region29: #{tpu_custom_call.1} parent=1 // pred_check
      _
    $region30: #{tpu_custom_call.1} parent=1 // pred_check_branch
      %1599 = sbr.rel (0) target = $region32
    $region31: #{tpu_custom_call.1} parent=1 // pred_region
      %1601 = vsyncadd [#allocation4], 0
      %s1602 = sshll.u32 [#allocation5], 4
      %s1603 = int_to_ptr.vmem [resolvable:$true] %s1602
      %s1604 = sshll.u32 %s4, 4
      %s1605 = int_to_ptr.hbm [resolvable:$true] %s1604
      %1610 = dma.vmem_to_hbm [thread:$0]  %s1603, 8192, %s1605, [#allocation4], 512, 512, 32
    $region32: #{tpu_custom_call.1} parent=1 // pred_fallthru
      _
    // Predicated region
    $region33: #{tpu_custom_call.1} parent=1 // pred_check
      _
    $region34: #{tpu_custom_call.1} parent=1 // pred_check_branch
      %1612 = sbr.rel (0) target = $region36
    $region35: #{tpu_custom_call.1} parent=1 // pred_region
      %1614 = dma.done [#allocation4], 8192
    $region36: #{tpu_custom_call.1} parent=1 // pred_fallthru
      _
    %1615 = vsyncpa [#allocation3], 1
    %1616 = vsyncpa [#allocation4], 1

</llo_original>
